<compile_context>
chip_gen: v5e
topology: v5e:2x2
jax: 0.10.0
libtpu: 0.0.40
codegen_flags: <defaults>
</compile_context>

<pallas_src>
import functools

import jax
import jax.numpy as jnp
from jax.experimental import pallas as pl
from jax.experimental.pallas import tpu as pltpu

EPS = 1e-5  # PyTorch BatchNorm2d default eps


def _vmem():
    return pl.BlockSpec(memory_space=pltpu.MemorySpace.VMEM)


# ----------------------------------------------------------------------------
# Pallas kernels (single block; all operands are tiny and fit VMEM easily)
# ----------------------------------------------------------------------------
def _conv_bn_relu_kernel(groups, p_ref, w_ref, b_ref, g_ref, be_ref, o_ref):
    """out (groups*C, M) = W @ patches (+bias) -> train-mode BN -> ReLU.

    BN statistics are per *logical* channel c, i.e. jointly over the `groups`
    row-groups (the sub-pixel decoder puts the 4 output parity planes of each
    channel in 4 different row groups) and over the M (lane) axis.
    """
    acc = jnp.dot(w_ref[...], p_ref[...], preferred_element_type=jnp.float32)
    acc = acc + b_ref[...]                               # (groups*C, M) + (groups*C, 1)
    gc, m = acc.shape
    c = gc // groups
    # one-pass stats: sum and sum-of-squares along lanes, then fold the groups
    s = jnp.sum(acc, axis=1, keepdims=True)              # (groups*C, 1)
    ss = jnp.sum(acc * acc, axis=1, keepdims=True)
    s_c = sum(s[g * c:(g + 1) * c] for g in range(groups))
    ss_c = sum(ss[g * c:(g + 1) * c] for g in range(groups))
    inv_n = 1.0 / float(groups * m)
    mean = s_c * inv_n
    var = jnp.maximum(ss_c * inv_n - mean * mean, 0.0)   # biased var, like torch train BN
    inv = jax.lax.rsqrt(var + EPS)
    scale = g_ref[...] * inv                             # (C, 1)
    shift = be_ref[...] - mean * scale                   # (C, 1)
    for g in range(groups):                              # static, aligned sublane slices
        o_ref[g * c:(g + 1) * c, :] = jnp.maximum(
            acc[g * c:(g + 1) * c, :] * scale + shift, 0.0)


def _conv_tanh_kernel(p_ref, w_ref, b_ref, o_ref):
    acc = jnp.dot(w_ref[...], p_ref[...], preferred_element_type=jnp.float32)
    o_ref[...] = jnp.tanh(acc + b_ref[...])


def _fc_fused_kernel(x_ref, w1_ref, b1_ref, w2_ref, b2_ref, lat_ref, h_ref):
    lat = jnp.dot(w1_ref[...], x_ref[...], preferred_element_type=jnp.float32) + b1_ref[...]
    lat_ref[...] = lat
    h_ref[...] = jnp.dot(w2_ref[...], lat, preferred_element_type=jnp.float32) + b2_ref[...]


# ----------------------------------------------------------------------------
# Pallas wrappers
# ----------------------------------------------------------------------------
def conv_bn_relu(patches, w2d, bias, gamma, beta, *, groups):
    n, m = w2d.shape[0], patches.shape[1]
    return pl.pallas_call(
        functools.partial(_conv_bn_relu_kernel, groups),
        out_shape=jax.ShapeDtypeStruct((n, m), jnp.float32),
        in_specs=[_vmem()] * 5,
        out_specs=_vmem(),
    )(patches.astype(jnp.bfloat16), w2d, bias, gamma, beta)


def conv_tanh(patches, w2d, bias):
    n, m = w2d.shape[0], patches.shape[1]
    return pl.pallas_call(
        _conv_tanh_kernel,
        out_shape=jax.ShapeDtypeStruct((n, m), jnp.float32),
        in_specs=[_vmem()] * 3,
        out_specs=_vmem(),
    )(patches.astype(jnp.bfloat16), w2d, bias)


def fc_fused(x_t, w1, b1, w2, b2):
    b = x_t.shape[1]
    return pl.pallas_call(
        _fc_fused_kernel,
        out_shape=(jax.ShapeDtypeStruct((w1.shape[0], b), jnp.float32),
                   jax.ShapeDtypeStruct((w2.shape[0], b), jnp.float32)),
        in_specs=[_vmem()] * 5,
        out_specs=(_vmem(), _vmem()),
    )(x_t, w1, b1, w2, b2)


# ----------------------------------------------------------------------------
# XLA glue: patch / tap extraction, parity-plane interleave (pure data movement)
# ----------------------------------------------------------------------------
def im2col_cnhw(x, stride, pad):
    """3x3 patches of a CNHW tensor -> (C*9, B*Ho*Wo); rows ordered (ci, i, j)."""
    c, b, h, w = x.shape
    xp = jnp.pad(x, ((0, 0), (0, 0), (pad, pad), (pad, pad)))
    ho = (h + 2 * pad - 3) // stride + 1
    wo = (w + 2 * pad - 3) // stride + 1
    taps = [xp[:, :, i:i + stride * ho:stride, j:j + stride * wo:stride]
            for i in range(3) for j in range(3)]
    col = jnp.stack(taps, axis=1)                        # (C, 9, B, Ho, Wo)
    return col.reshape(c * 9, b * ho * wo), ho, wo


def subpixel_patches(x):
    """4 unit-shift taps of a CNHW tensor -> (4*C, B*H*W); rows ordered (t, ci)."""
    c, b, h, w = x.shape
    xp = jnp.pad(x, ((0, 0), (0, 0), (0, 1), (0, 1)))
    taps = [xp[:, :, 0:h, 0:w], xp[:, :, 0:h, 1:w + 1],
            xp[:, :, 1:h + 1, 0:w], xp[:, :, 1:h + 1, 1:w + 1]]
    return jnp.stack(taps, axis=0).reshape(4 * c, b * h * w)


def interleave_planes(planes, cout, b, h, w):
    """(4*Cout, B*H*W) parity planes -> (Cout, B, 2H, 2W) CNHW output."""
    x = planes.reshape(2, 2, cout, b, h, w)              # (pr, pc, co, b, y, x)
    x = x.transpose(2, 3, 4, 0, 5, 1)                    # (co, b, y, pr, x, pc)
    return x.reshape(cout, b, 2 * h, 2 * w)


def make_subpixel_weight(wt):
    """torch ConvTranspose2d weight (Cin, Cout, 3, 3) with stride=2, pad=1,
    output_padding=1 -> sub-pixel matmul weight (4*Cout, 4*Cin).
    Row = (pr*2+pc)*Cout + co (output parity plane), column = t*Cin + ci with
    taps t in [x(y,x), x(y,x+1), x(y+1,x), x(y+1,x+1)] (zero-padded bottom/right)."""
    cin, cout = wt.shape[0], wt.shape[1]
    wall = jnp.zeros((4 * cout, 4 * cin), jnp.float32)
    assign = {(0, 0): [(0, 1, 1)],
              (0, 1): [(0, 1, 2), (1, 1, 0)],
              (1, 0): [(0, 2, 1), (2, 0, 1)],
              (1, 1): [(0, 2, 2), (1, 2, 0), (2, 0, 2), (3, 0, 0)]}
    for (pr, pc), taps in assign.items():
        p = pr * 2 + pc
        for (t, i, j) in taps:
            wall = wall.at[p * cout:(p + 1) * cout, t * cin:(t + 1) * cin].set(wt[:, :, i, j].T)
    return wall


# ----------------------------------------------------------------------------
# Parameters (deterministic init, same shapes as the PyTorch module)
# ----------------------------------------------------------------------------
def init_params(key):
    def nrm(k, shape, scale=0.05):
        return scale * jax.random.normal(k, shape, dtype=jnp.float32)

    keys = jax.random.split(key, 16)
    p = {}
    enc_io = [(3, 32), (32, 16), (16, 8)]
    for i, (cin, cout) in enumerate(enc_io):
        p[f"enc{i}_w"] = nrm(keys[2 * i], (cout, cin, 3, 3))
        p[f"enc{i}_b"] = nrm(keys[2 * i + 1], (cout,))
        p[f"enc{i}_gamma"] = jnp.ones((cout,), jnp.float32)
        p[f"enc{i}_beta"] = jnp.zeros((cout,), jnp.float32)
    p["fc1_w"] = nrm(keys[6], (64, 128))     # torch Linear weight: (out, in)
    p["fc1_b"] = nrm(keys[7], (64,))
    p["fc2_w"] = nrm(keys[8], (128, 64))
    p["fc2_b"] = nrm(keys[9], (128,))
    dec_io = [(8, 16), (16, 32), (32, 3)]
    for i, (cin, cout) in enumerate(dec_io):
        p[f"dec{i}_w"] = nrm(keys[10 + 2 * i], (cin, cout, 3, 3))  # torch ConvT: (Cin, Cout, k, k)
        p[f"dec{i}_b"] = nrm(keys[11 + 2 * i], (cout,))
        if i < 2:
            p[f"dec{i}_gamma"] = jnp.ones((cout,), jnp.float32)
            p[f"dec{i}_beta"] = jnp.zeros((cout,), jnp.float32)
    return p


def prepare_params(p):
    """One-time weight preprocessing (hoisted out of the forward pass)."""
    prep = {}
    for i in range(3):
        w = p[f"enc{i}_w"]                                        # (Cout, Cin, 3, 3)
        prep[f"enc{i}_w2d"] = w.reshape(w.shape[0], -1).astype(jnp.bfloat16)   # (Cout, Cin*9)
        prep[f"enc{i}_b"] = p[f"enc{i}_b"].reshape(-1, 1)
        prep[f"enc{i}_gamma"] = p[f"enc{i}_gamma"].reshape(-1, 1)
        prep[f"enc{i}_beta"] = p[f"enc{i}_beta"].reshape(-1, 1)
    prep["fc1_w"] = p["fc1_w"]
    prep["fc1_b"] = p["fc1_b"].reshape(-1, 1)
    prep["fc2_w"] = p["fc2_w"]
    prep["fc2_b"] = p["fc2_b"].reshape(-1, 1)
    for i in range(3):
        wall = make_subpixel_weight(p[f"dec{i}_w"])               # (4*Cout, 4*Cin)
        prep[f"dec{i}_w2d"] = wall.astype(jnp.bfloat16)
        prep[f"dec{i}_b"] = jnp.tile(p[f"dec{i}_b"], 4).reshape(-1, 1)   # per parity plane
        if i < 2:
            prep[f"dec{i}_gamma"] = p[f"dec{i}_gamma"].reshape(-1, 1)    # (Cout, 1), not tiled
            prep[f"dec{i}_beta"] = p[f"dec{i}_beta"].reshape(-1, 1)
    return prep


# ----------------------------------------------------------------------------
# Forward pass
# ----------------------------------------------------------------------------
def autoencoder_forward(prep, x):
    b = x.shape[0]
    h = jnp.transpose(x, (1, 0, 2, 3))                   # NCHW -> CNHW, once

    # ---- encoder: 3 x [Conv2d(3, s2, p1) -> BN -> ReLU] ----
    for i in range(3):
        cols, ho, wo = im2col_cnhw(h, stride=2, pad=1)   # (Cin*9, B*Ho*Wo)
        out = conv_bn_relu(cols, prep[f"enc{i}_w2d"], prep[f"enc{i}_b"],
                           prep[f"enc{i}_gamma"], prep[f"enc{i}_beta"], groups=1)
        h = out.reshape(out.shape[0], b, ho, wo)         # (Cout, B, Ho, Wo), no transpose

    # ---- bottleneck: flatten -> fc1 -> fc2 (fused) -> reshape (8, B, 4, 4) ----
    flat_t = jnp.transpose(h, (0, 2, 3, 1)).reshape(-1, b)        # (C*H*W, B) torch .view order
    latent_t, h2_t = fc_fused(flat_t, prep["fc1_w"], prep["fc1_b"],
                              prep["fc2_w"], prep["fc2_b"])
    latent = latent_t.T                                           # (B, 64)
    h = jnp.transpose(h2_t.reshape(8, 4, 4, b), (0, 3, 1, 2))     # (8, B, 4, 4) CNHW

    # ---- decoder: 2 x [ConvT(s2,p1,op1) -> BN -> ReLU] + [ConvT -> Tanh] ----
    for i in range(3):
        _, _, hh, ww = h.shape
        patches = subpixel_patches(h)                             # (4*Cin, B*H*W)
        if i < 2:
            planes = conv_bn_relu(patches, prep[f"dec{i}_w2d"], prep[f"dec{i}_b"],
                                  prep[f"dec{i}_gamma"], prep[f"dec{i}_beta"], groups=4)
        else:
            planes = conv_tanh(patches, prep[f"dec{i}_w2d"], prep[f"dec{i}_b"])
        cout = planes.shape[0] // 4
        h = interleave_planes(planes, cout, b, hh, ww)            # (Cout, B, 2H, 2W)

    recon = jnp.transpose(h, (1, 0, 2, 3))                # CNHW -> NCHW, once
    return recon, latent


# ----------------------------------------------------------------------------
if __name__ == "__main__":
    key = jax.random.PRNGKey(0)
    k_param, k_x = jax.random.split(key)
    params = init_params(k_param)
    prep = prepare_params(params)      # hoisted weight preprocessing (one time)

    # Input must be (B, 3, 32, 32): three stride-2 convs give 4x4x8 = 128 = fc1.in_features.
    x = jax.random.normal(k_x, (2, 3, 32, 32), dtype=jnp.float32)

    fwd = jax.jit(autoencoder_forward)
    recon, latent = fwd(prep, x)
    jax.block_until_ready((recon, latent))

    assert recon.shape == (2, 3, 32, 32), recon.shape
    assert latent.shape == (2, 64), latent.shape
    assert bool(jnp.all(jnp.isfinite(recon))) and bool(jnp.all(jnp.isfinite(latent)))
    print("KERNEL_OK")
</pallas_src>

<mosaic_0001>
module attributes {stable_mosaic.version = 11 : i64} {
  func.func @_conv_bn_relu_kernel(%arg0: memref<27x512xbf16, #tpu.memory_space<vmem>>, %arg1: memref<32x27xbf16, #tpu.memory_space<vmem>>, %arg2: memref<32x1xf32, #tpu.memory_space<vmem>>, %arg3: memref<32x1xf32, #tpu.memory_space<vmem>>, %arg4: memref<32x1xf32, #tpu.memory_space<vmem>>, %arg5: memref<32x512xf32, #tpu.memory_space<vmem>>) attributes {dimension_semantics = [], scalar_prefetch = 0 : i64, scratch_operands = 0 : i64, tpu.core_type = #tpu.core_type<tc>} {
    %c0 = arith.constant 0 : index
    %c0_0 = arith.constant 0 : index
    %0 = vector.load %arg1[%c0, %c0_0] : memref<32x27xbf16, #tpu.memory_space<vmem>>, vector<32x27xbf16>
    %c0_1 = arith.constant 0 : index
    %c0_2 = arith.constant 0 : index
    %1 = vector.load %arg0[%c0_1, %c0_2] : memref<27x512xbf16, #tpu.memory_space<vmem>>, vector<27x512xbf16>
    %cst = arith.constant dense<0.000000e+00> : vector<32x512xf32>
    %2 = tpu.matmul %0, %1, %cst {dimension_numbers = #tpu.dot_dimension_numbers<[1], [0], [0], [1], [0, 0, 1, 1], [], []>} : vector<32x27xbf16>, vector<27x512xbf16>, vector<32x512xf32> -> vector<32x512xf32>
    %c0_3 = arith.constant 0 : index
    %c0_4 = arith.constant 0 : index
    %3 = vector.load %arg2[%c0_3, %c0_4] : memref<32x1xf32, #tpu.memory_space<vmem>>, vector<32x1xf32>
    %4 = vector.broadcast %3 : vector<32x1xf32> to vector<32x512xf32>
    %5 = arith.addf %2, %4 : vector<32x512xf32>
    %cst_5 = arith.constant dense<0.000000e+00> : vector<32xf32>
    %6 = vector.multi_reduction <add>, %5, %cst_5 [1] : vector<32x512xf32> to vector<32xf32>
    %7 = vector.shape_cast %6 : vector<32xf32> to vector<32x1xf32>
    %8 = arith.mulf %5, %5 : vector<32x512xf32>
    %cst_6 = arith.constant dense<0.000000e+00> : vector<32xf32>
    %9 = vector.multi_reduction <add>, %8, %cst_6 [1] : vector<32x512xf32> to vector<32xf32>
    %10 = vector.shape_cast %9 : vector<32xf32> to vector<32x1xf32>
    %cst_7 = arith.constant 0.000000e+00 : f32
    %11 = vector.broadcast %cst_7 : f32 to vector<32x1xf32>
    %12 = arith.addf %11, %7 : vector<32x1xf32>
    %cst_8 = arith.constant 0.000000e+00 : f32
    %13 = vector.broadcast %cst_8 : f32 to vector<32x1xf32>
    %14 = arith.addf %13, %10 : vector<32x1xf32>
    %cst_9 = arith.constant 0.001953125 : f32
    %15 = vector.broadcast %cst_9 : f32 to vector<32x1xf32>
    %16 = arith.mulf %12, %15 : vector<32x1xf32>
    %cst_10 = arith.constant 0.001953125 : f32
    %17 = vector.broadcast %cst_10 : f32 to vector<32x1xf32>
    %18 = arith.mulf %14, %17 : vector<32x1xf32>
    %19 = arith.mulf %16, %16 : vector<32x1xf32>
    %20 = arith.subf %18, %19 : vector<32x1xf32>
    %cst_11 = arith.constant 0.000000e+00 : f32
    %21 = vector.broadcast %cst_11 : f32 to vector<32x1xf32>
    %22 = arith.maximumf %20, %21 : vector<32x1xf32>
    %cst_12 = arith.constant 9.99999974E-6 : f32
    %23 = vector.broadcast %cst_12 : f32 to vector<32x1xf32>
    %24 = arith.addf %22, %23 : vector<32x1xf32>
    %25 = math.rsqrt %24 : vector<32x1xf32>
    %c0_13 = arith.constant 0 : index
    %c0_14 = arith.constant 0 : index
    %26 = vector.load %arg3[%c0_13, %c0_14] : memref<32x1xf32, #tpu.memory_space<vmem>>, vector<32x1xf32>
    %27 = arith.mulf %26, %25 : vector<32x1xf32>
    %c0_15 = arith.constant 0 : index
    %c0_16 = arith.constant 0 : index
    %28 = vector.load %arg4[%c0_15, %c0_16] : memref<32x1xf32, #tpu.memory_space<vmem>>, vector<32x1xf32>
    %29 = arith.mulf %16, %27 : vector<32x1xf32>
    %30 = arith.subf %28, %29 : vector<32x1xf32>
    %31 = vector.broadcast %27 : vector<32x1xf32> to vector<32x512xf32>
    %32 = arith.mulf %5, %31 : vector<32x512xf32>
    %33 = vector.broadcast %30 : vector<32x1xf32> to vector<32x512xf32>
    %34 = arith.addf %32, %33 : vector<32x512xf32>
    %cst_17 = arith.constant 0.000000e+00 : f32
    %35 = vector.broadcast %cst_17 : f32 to vector<32x512xf32>
    %36 = arith.maximumf %34, %35 : vector<32x512xf32>
    %c0_18 = arith.constant 0 : index
    %c0_19 = arith.constant 0 : index
    %37 = vector.load %arg5[%c0_18, %c0_19] : memref<32x512xf32, #tpu.memory_space<vmem>>, vector<32x512xf32>
    tpu.vector_store %arg5[%c0_18, %c0_19], %36 {strides = array<i32>} : memref<32x512xf32, #tpu.memory_space<vmem>>, vector<32x512xf32>,
    return
  }
}

module attributes {stable_mosaic.version = 11 : i64} {
  func.func @_conv_bn_relu_kernel(%arg0: memref<288x128xbf16, #tpu.memory_space<vmem>>, %arg1: memref<16x288xbf16, #tpu.memory_space<vmem>>, %arg2: memref<16x1xf32, #tpu.memory_space<vmem>>, %arg3: memref<16x1xf32, #tpu.memory_space<vmem>>, %arg4: memref<16x1xf32, #tpu.memory_space<vmem>>, %arg5: memref<16x128xf32, #tpu.memory_space<vmem>>) attributes {dimension_semantics = [], scalar_prefetch = 0 : i64, scratch_operands = 0 : i64, tpu.core_type = #tpu.core_type<tc>} {
    %c0 = arith.constant 0 : index
    %c0_0 = arith.constant 0 : index
    %0 = vector.load %arg1[%c0, %c0_0] : memref<16x288xbf16, #tpu.memory_space<vmem>>, vector<16x288xbf16>
    %c0_1 = arith.constant 0 : index
    %c0_2 = arith.constant 0 : index
    %1 = vector.load %arg0[%c0_1, %c0_2] : memref<288x128xbf16, #tpu.memory_space<vmem>>, vector<288x128xbf16>
    %cst = arith.constant dense<0.000000e+00> : vector<16x128xf32>
    %2 = tpu.matmul %0, %1, %cst {dimension_numbers = #tpu.dot_dimension_numbers<[1], [0], [0], [1], [0, 0, 1, 1], [], []>} : vector<16x288xbf16>, vector<288x128xbf16>, vector<16x128xf32> -> vector<16x128xf32>
    %c0_3 = arith.constant 0 : index
    %c0_4 = arith.constant 0 : index
    %3 = vector.load %arg2[%c0_3, %c0_4] : memref<16x1xf32, #tpu.memory_space<vmem>>, vector<16x1xf32>
    %4 = vector.broadcast %3 : vector<16x1xf32> to vector<16x128xf32>
    %5 = arith.addf %2, %4 : vector<16x128xf32>
    %cst_5 = arith.constant dense<0.000000e+00> : vector<16xf32>
    %6 = vector.multi_reduction <add>, %5, %cst_5 [1] : vector<16x128xf32> to vector<16xf32>
    %7 = vector.shape_cast %6 : vector<16xf32> to vector<16x1xf32>
    %8 = arith.mulf %5, %5 : vector<16x128xf32>
    %cst_6 = arith.constant dense<0.000000e+00> : vector<16xf32>
    %9 = vector.multi_reduction <add>, %8, %cst_6 [1] : vector<16x128xf32> to vector<16xf32>
    %10 = vector.shape_cast %9 : vector<16xf32> to vector<16x1xf32>
    %cst_7 = arith.constant 0.000000e+00 : f32
    %11 = vector.broadcast %cst_7 : f32 to vector<16x1xf32>
    %12 = arith.addf %11, %7 : vector<16x1xf32>
    %cst_8 = arith.constant 0.000000e+00 : f32
    %13 = vector.broadcast %cst_8 : f32 to vector<16x1xf32>
    %14 = arith.addf %13, %10 : vector<16x1xf32>
    %cst_9 = arith.constant 7.812500e-03 : f32
    %15 = vector.broadcast %cst_9 : f32 to vector<16x1xf32>
    %16 = arith.mulf %12, %15 : vector<16x1xf32>
    %cst_10 = arith.constant 7.812500e-03 : f32
    %17 = vector.broadcast %cst_10 : f32 to vector<16x1xf32>
    %18 = arith.mulf %14, %17 : vector<16x1xf32>
    %19 = arith.mulf %16, %16 : vector<16x1xf32>
    %20 = arith.subf %18, %19 : vector<16x1xf32>
    %cst_11 = arith.constant 0.000000e+00 : f32
    %21 = vector.broadcast %cst_11 : f32 to vector<16x1xf32>
    %22 = arith.maximumf %20, %21 : vector<16x1xf32>
    %cst_12 = arith.constant 9.99999974E-6 : f32
    %23 = vector.broadcast %cst_12 : f32 to vector<16x1xf32>
    %24 = arith.addf %22, %23 : vector<16x1xf32>
    %25 = math.rsqrt %24 : vector<16x1xf32>
    %c0_13 = arith.constant 0 : index
    %c0_14 = arith.constant 0 : index
    %26 = vector.load %arg3[%c0_13, %c0_14] : memref<16x1xf32, #tpu.memory_space<vmem>>, vector<16x1xf32>
    %27 = arith.mulf %26, %25 : vector<16x1xf32>
    %c0_15 = arith.constant 0 : index
    %c0_16 = arith.constant 0 : index
    %28 = vector.load %arg4[%c0_15, %c0_16] : memref<16x1xf32, #tpu.memory_space<vmem>>, vector<16x1xf32>
    %29 = arith.mulf %16, %27 : vector<16x1xf32>
    %30 = arith.subf %28, %29 : vector<16x1xf32>
    %31 = vector.broadcast %27 : vector<16x1xf32> to vector<16x128xf32>
    %32 = arith.mulf %5, %31 : vector<16x128xf32>
    %33 = vector.broadcast %30 : vector<16x1xf32> to vector<16x128xf32>
    %34 = arith.addf %32, %33 : vector<16x128xf32>
    %cst_17 = arith.constant 0.000000e+00 : f32
    %35 = vector.broadcast %cst_17 : f32 to vector<16x128xf32>
    %36 = arith.maximumf %34, %35 : vector<16x128xf32>
    %c0_18 = arith.constant 0 : index
    %c0_19 = arith.constant 0 : index
    %37 = vector.load %arg5[%c0_18, %c0_19] : memref<16x128xf32, #tpu.memory_space<vmem>>, vector<16x128xf32>
    tpu.vector_store %arg5[%c0_18, %c0_19], %36 {strides = array<i32>} : memref<16x128xf32, #tpu.memory_space<vmem>>, vector<16x128xf32>,
    return
  }
}

module attributes {stable_mosaic.version = 11 : i64} {
  func.func @_conv_bn_relu_kernel(%arg0: memref<144x32xbf16, #tpu.memory_space<vmem>>, %arg1: memref<8x144xbf16, #tpu.memory_space<vmem>>, %arg2: memref<8x1xf32, #tpu.memory_space<vmem>>, %arg3: memref<8x1xf32, #tpu.memory_space<vmem>>, %arg4: memref<8x1xf32, #tpu.memory_space<vmem>>, %arg5: memref<8x32xf32, #tpu.memory_space<vmem>>) attributes {dimension_semantics = [], scalar_prefetch = 0 : i64, scratch_operands = 0 : i64, tpu.core_type = #tpu.core_type<tc>} {
    %c0 = arith.constant 0 : index
    %c0_0 = arith.constant 0 : index
    %0 = vector.load %arg1[%c0, %c0_0] : memref<8x144xbf16, #tpu.memory_space<vmem>>, vector<8x144xbf16>
    %c0_1 = arith.constant 0 : index
    %c0_2 = arith.constant 0 : index
    %1 = vector.load %arg0[%c0_1, %c0_2] : memref<144x32xbf16, #tpu.memory_space<vmem>>, vector<144x32xbf16>
    %cst = arith.constant dense<0.000000e+00> : vector<8x32xf32>
    %2 = tpu.matmul %0, %1, %cst {dimension_numbers = #tpu.dot_dimension_numbers<[1], [0], [0], [1], [0, 0, 1, 1], [], []>} : vector<8x144xbf16>, vector<144x32xbf16>, vector<8x32xf32> -> vector<8x32xf32>
    %c0_3 = arith.constant 0 : index
    %c0_4 = arith.constant 0 : index
    %3 = vector.load %arg2[%c0_3, %c0_4] : memref<8x1xf32, #tpu.memory_space<vmem>>, vector<8x1xf32>
    %4 = vector.broadcast %3 : vector<8x1xf32> to vector<8x32xf32>
    %5 = arith.addf %2, %4 : vector<8x32xf32>
    %cst_5 = arith.constant dense<0.000000e+00> : vector<8xf32>
    %6 = vector.multi_reduction <add>, %5, %cst_5 [1] : vector<8x32xf32> to vector<8xf32>
    %7 = vector.shape_cast %6 : vector<8xf32> to vector<8x1xf32>
    %8 = arith.mulf %5, %5 : vector<8x32xf32>
    %cst_6 = arith.constant dense<0.000000e+00> : vector<8xf32>
    %9 = vector.multi_reduction <add>, %8, %cst_6 [1] : vector<8x32xf32> to vector<8xf32>
    %10 = vector.shape_cast %9 : vector<8xf32> to vector<8x1xf32>
    %cst_7 = arith.constant 0.000000e+00 : f32
    %11 = vector.broadcast %cst_7 : f32 to vector<8x1xf32>
    %12 = arith.addf %11, %7 : vector<8x1xf32>
    %cst_8 = arith.constant 0.000000e+00 : f32
    %13 = vector.broadcast %cst_8 : f32 to vector<8x1xf32>
    %14 = arith.addf %13, %10 : vector<8x1xf32>
    %cst_9 = arith.constant 3.125000e-02 : f32
    %15 = vector.broadcast %cst_9 : f32 to vector<8x1xf32>
    %16 = arith.mulf %12, %15 : vector<8x1xf32>
    %cst_10 = arith.constant 3.125000e-02 : f32
    %17 = vector.broadcast %cst_10 : f32 to vector<8x1xf32>
    %18 = arith.mulf %14, %17 : vector<8x1xf32>
    %19 = arith.mulf %16, %16 : vector<8x1xf32>
    %20 = arith.subf %18, %19 : vector<8x1xf32>
    %cst_11 = arith.constant 0.000000e+00 : f32
    %21 = vector.broadcast %cst_11 : f32 to vector<8x1xf32>
    %22 = arith.maximumf %20, %21 : vector<8x1xf32>
    %cst_12 = arith.constant 9.99999974E-6 : f32
    %23 = vector.broadcast %cst_12 : f32 to vector<8x1xf32>
    %24 = arith.addf %22, %23 : vector<8x1xf32>
    %25 = math.rsqrt %24 : vector<8x1xf32>
    %c0_13 = arith.constant 0 : index
    %c0_14 = arith.constant 0 : index
    %26 = vector.load %arg3[%c0_13, %c0_14] : memref<8x1xf32, #tpu.memory_space<vmem>>, vector<8x1xf32>
    %27 = arith.mulf %26, %25 : vector<8x1xf32>
    %c0_15 = arith.constant 0 : index
    %c0_16 = arith.constant 0 : index
    %28 = vector.load %arg4[%c0_15, %c0_16] : memref<8x1xf32, #tpu.memory_space<vmem>>, vector<8x1xf32>
    %29 = arith.mulf %16, %27 : vector<8x1xf32>
    %30 = arith.subf %28, %29 : vector<8x1xf32>
    %31 = vector.broadcast %27 : vector<8x1xf32> to vector<8x32xf32>
    %32 = arith.mulf %5, %31 : vector<8x32xf32>
    %33 = vector.broadcast %30 : vector<8x1xf32> to vector<8x32xf32>
    %34 = arith.addf %32, %33 : vector<8x32xf32>
    %cst_17 = arith.constant 0.000000e+00 : f32
    %35 = vector.broadcast %cst_17 : f32 to vector<8x32xf32>
    %36 = arith.maximumf %34, %35 : vector<8x32xf32>
    %c0_18 = arith.constant 0 : index
    %c0_19 = arith.constant 0 : index
    %37 = vector.load %arg5[%c0_18, %c0_19] : memref<8x32xf32, #tpu.memory_space<vmem>>, vector<8x32xf32>
    tpu.vector_store %arg5[%c0_18, %c0_19], %36 {strides = array<i32>} : memref<8x32xf32, #tpu.memory_space<vmem>>, vector<8x32xf32>,
    return
  }
}

module attributes {stable_mosaic.version = 11 : i64} {
  func.func @_fc_fused_kernel(%arg0: memref<128x2xf32, #tpu.memory_space<vmem>>, %arg1: memref<64x128xf32, #tpu.memory_space<vmem>>, %arg2: memref<64x1xf32, #tpu.memory_space<vmem>>, %arg3: memref<128x64xf32, #tpu.memory_space<vmem>>, %arg4: memref<128x1xf32, #tpu.memory_space<vmem>>, %arg5: memref<64x2xf32, #tpu.memory_space<vmem>>, %arg6: memref<128x2xf32, #tpu.memory_space<vmem>>) attributes {dimension_semantics = [], scalar_prefetch = 0 : i64, scratch_operands = 0 : i64, tpu.core_type = #tpu.core_type<tc>} {
    %c0 = arith.constant 0 : index
    %c0_0 = arith.constant 0 : index
    %0 = vector.load %arg1[%c0, %c0_0] : memref<64x128xf32, #tpu.memory_space<vmem>>, vector<64x128xf32>
    %c0_1 = arith.constant 0 : index
    %c0_2 = arith.constant 0 : index
    %1 = vector.load %arg0[%c0_1, %c0_2] : memref<128x2xf32, #tpu.memory_space<vmem>>, vector<128x2xf32>
    %cst = arith.constant dense<0.000000e+00> : vector<64x2xf32>
    %2 = tpu.matmul %0, %1, %cst {dimension_numbers = #tpu.dot_dimension_numbers<[1], [0], [0], [1], [0, 0, 1, 1], [], []>} : vector<64x128xf32>, vector<128x2xf32>, vector<64x2xf32> -> vector<64x2xf32>
    %c0_3 = arith.constant 0 : index
    %c0_4 = arith.constant 0 : index
    %3 = vector.load %arg2[%c0_3, %c0_4] : memref<64x1xf32, #tpu.memory_space<vmem>>, vector<64x1xf32>
    %4 = vector.broadcast %3 : vector<64x1xf32> to vector<64x2xf32>
    %5 = arith.addf %2, %4 : vector<64x2xf32>
    %c0_5 = arith.constant 0 : index
    %c0_6 = arith.constant 0 : index
    %6 = vector.load %arg5[%c0_5, %c0_6] : memref<64x2xf32, #tpu.memory_space<vmem>>, vector<64x2xf32>
    tpu.vector_store %arg5[%c0_5, %c0_6], %5 {strides = array<i32>} : memref<64x2xf32, #tpu.memory_space<vmem>>, vector<64x2xf32>,
    %c0_7 = arith.constant 0 : index
    %c0_8 = arith.constant 0 : index
    %7 = vector.load %arg3[%c0_7, %c0_8] : memref<128x64xf32, #tpu.memory_space<vmem>>, vector<128x64xf32>
    %cst_9 = arith.constant dense<0.000000e+00> : vector<128x2xf32>
    %8 = tpu.matmul %7, %5, %cst_9 {dimension_numbers = #tpu.dot_dimension_numbers<[1], [0], [0], [1], [0, 0, 1, 1], [], []>} : vector<128x64xf32>, vector<64x2xf32>, vector<128x2xf32> -> vector<128x2xf32>
    %c0_10 = arith.constant 0 : index
    %c0_11 = arith.constant 0 : index
    %9 = vector.load %arg4[%c0_10, %c0_11] : memref<128x1xf32, #tpu.memory_space<vmem>>, vector<128x1xf32>
    %10 = vector.broadcast %9 : vector<128x1xf32> to vector<128x2xf32>
    %11 = arith.addf %8, %10 : vector<128x2xf32>
    %c0_12 = arith.constant 0 : index
    %c0_13 = arith.constant 0 : index
    %12 = vector.load %arg6[%c0_12, %c0_13] : memref<128x2xf32, #tpu.memory_space<vmem>>, vector<128x2xf32>
    tpu.vector_store %arg6[%c0_12, %c0_13], %11 {strides = array<i32>} : memref<128x2xf32, #tpu.memory_space<vmem>>, vector<128x2xf32>,
    return
  }
}

module attributes {stable_mosaic.version = 11 : i64} {
  func.func @_conv_bn_relu_kernel(%arg0: memref<32x32xbf16, #tpu.memory_space<vmem>>, %arg1: memref<64x32xbf16, #tpu.memory_space<vmem>>, %arg2: memref<64x1xf32, #tpu.memory_space<vmem>>, %arg3: memref<16x1xf32, #tpu.memory_space<vmem>>, %arg4: memref<16x1xf32, #tpu.memory_space<vmem>>, %arg5: memref<64x32xf32, #tpu.memory_space<vmem>>) attributes {dimension_semantics = [], scalar_prefetch = 0 : i64, scratch_operands = 0 : i64, tpu.core_type = #tpu.core_type<tc>} {
    %c0 = arith.constant 0 : index
    %c0_0 = arith.constant 0 : index
    %0 = vector.load %arg1[%c0, %c0_0] : memref<64x32xbf16, #tpu.memory_space<vmem>>, vector<64x32xbf16>
    %c0_1 = arith.constant 0 : index
    %c0_2 = arith.constant 0 : index
    %1 = vector.load %arg0[%c0_1, %c0_2] : memref<32x32xbf16, #tpu.memory_space<vmem>>, vector<32x32xbf16>
    %cst = arith.constant dense<0.000000e+00> : vector<64x32xf32>
    %2 = tpu.matmul %0, %1, %cst {dimension_numbers = #tpu.dot_dimension_numbers<[1], [0], [0], [1], [0, 0, 1, 1], [], []>} : vector<64x32xbf16>, vector<32x32xbf16>, vector<64x32xf32> -> vector<64x32xf32>
    %c0_3 = arith.constant 0 : index
    %c0_4 = arith.constant 0 : index
    %3 = vector.load %arg2[%c0_3, %c0_4] : memref<64x1xf32, #tpu.memory_space<vmem>>, vector<64x1xf32>
    %4 = vector.broadcast %3 : vector<64x1xf32> to vector<64x32xf32>
    %5 = arith.addf %2, %4 : vector<64x32xf32>
    %cst_5 = arith.constant dense<0.000000e+00> : vector<64xf32>
    %6 = vector.multi_reduction <add>, %5, %cst_5 [1] : vector<64x32xf32> to vector<64xf32>
    %7 = vector.shape_cast %6 : vector<64xf32> to vector<64x1xf32>
    %8 = arith.mulf %5, %5 : vector<64x32xf32>
    %cst_6 = arith.constant dense<0.000000e+00> : vector<64xf32>
    %9 = vector.multi_reduction <add>, %8, %cst_6 [1] : vector<64x32xf32> to vector<64xf32>
    %10 = vector.shape_cast %9 : vector<64xf32> to vector<64x1xf32>
    %11 = vector.extract_strided_slice %7 {offsets = [0, 0], sizes = [16, 1], strides = [1, 1]} : vector<64x1xf32> to vector<16x1xf32>
    %cst_7 = arith.constant 0.000000e+00 : f32
    %12 = vector.broadcast %cst_7 : f32 to vector<16x1xf32>
    %13 = arith.addf %12, %11 : vector<16x1xf32>
    %14 = vector.extract_strided_slice %7 {offsets = [16, 0], sizes = [16, 1], strides = [1, 1]} : vector<64x1xf32> to vector<16x1xf32>
    %15 = arith.addf %13, %14 : vector<16x1xf32>
    %16 = vector.extract_strided_slice %7 {offsets = [32, 0], sizes = [16, 1], strides = [1, 1]} : vector<64x1xf32> to vector<16x1xf32>
    %17 = arith.addf %15, %16 : vector<16x1xf32>
    %18 = vector.extract_strided_slice %7 {offsets = [48, 0], sizes = [16, 1], strides = [1, 1]} : vector<64x1xf32> to vector<16x1xf32>
    %19 = arith.addf %17, %18 : vector<16x1xf32>
    %20 = vector.extract_strided_slice %10 {offsets = [0, 0], sizes = [16, 1], strides = [1, 1]} : vector<64x1xf32> to vector<16x1xf32>
    %cst_8 = arith.constant 0.000000e+00 : f32
    %21 = vector.broadcast %cst_8 : f32 to vector<16x1xf32>
    %22 = arith.addf %21, %20 : vector<16x1xf32>
    %23 = vector.extract_strided_slice %10 {offsets = [16, 0], sizes = [16, 1], strides = [1, 1]} : vector<64x1xf32> to vector<16x1xf32>
    %24 = arith.addf %22, %23 : vector<16x1xf32>
    %25 = vector.extract_strided_slice %10 {offsets = [32, 0], sizes = [16, 1], strides = [1, 1]} : vector<64x1xf32> to vector<16x1xf32>
    %26 = arith.addf %24, %25 : vector<16x1xf32>
    %27 = vector.extract_strided_slice %10 {offsets = [48, 0], sizes = [16, 1], strides = [1, 1]} : vector<64x1xf32> to vector<16x1xf32>
    %28 = arith.addf %26, %27 : vector<16x1xf32>
    %cst_9 = arith.constant 7.812500e-03 : f32
    %29 = vector.broadcast %cst_9 : f32 to vector<16x1xf32>
    %30 = arith.mulf %19, %29 : vector<16x1xf32>
    %cst_10 = arith.constant 7.812500e-03 : f32
    %31 = vector.broadcast %cst_10 : f32 to vector<16x1xf32>
    %32 = arith.mulf %28, %31 : vector<16x1xf32>
    %33 = arith.mulf %30, %30 : vector<16x1xf32>
    %34 = arith.subf %32, %33 : vector<16x1xf32>
    %cst_11 = arith.constant 0.000000e+00 : f32
    %35 = vector.broadcast %cst_11 : f32 to vector<16x1xf32>
    %36 = arith.maximumf %34, %35 : vector<16x1xf32>
    %cst_12 = arith.constant 9.99999974E-6 : f32
    %37 = vector.broadcast %cst_12 : f32 to vector<16x1xf32>
    %38 = arith.addf %36, %37 : vector<16x1xf32>
    %39 = math.rsqrt %38 : vector<16x1xf32>
    %c0_13 = arith.constant 0 : index
    %c0_14 = arith.constant 0 : index
    %40 = vector.load %arg3[%c0_13, %c0_14] : memref<16x1xf32, #tpu.memory_space<vmem>>, vector<16x1xf32>
    %41 = arith.mulf %40, %39 : vector<16x1xf32>
    %c0_15 = arith.constant 0 : index
    %c0_16 = arith.constant 0 : index
    %42 = vector.load %arg4[%c0_15, %c0_16] : memref<16x1xf32, #tpu.memory_space<vmem>>, vector<16x1xf32>
    %43 = arith.mulf %30, %41 : vector<16x1xf32>
    %44 = arith.subf %42, %43 : vector<16x1xf32>
    %45 = vector.extract_strided_slice %5 {offsets = [0, 0], sizes = [16, 32], strides = [1, 1]} : vector<64x32xf32> to vector<16x32xf32>
    %46 = vector.broadcast %41 : vector<16x1xf32> to vector<16x32xf32>
    %47 = arith.mulf %45, %46 : vector<16x32xf32>
    %48 = vector.broadcast %44 : vector<16x1xf32> to vector<16x32xf32>
    %49 = arith.addf %47, %48 : vector<16x32xf32>
    %cst_17 = arith.constant 0.000000e+00 : f32
    %50 = vector.broadcast %cst_17 : f32 to vector<16x32xf32>
    %51 = arith.maximumf %49, %50 : vector<16x32xf32>
    %c0_18 = arith.constant 0 : index
    %c0_19 = arith.constant 0 : index
    %52 = vector.load %arg5[%c0_18, %c0_19] : memref<64x32xf32, #tpu.memory_space<vmem>>, vector<16x32xf32>
    tpu.vector_store %arg5[%c0_18, %c0_19], %51 {strides = array<i32>} : memref<64x32xf32, #tpu.memory_space<vmem>>, vector<16x32xf32>,
    %53 = vector.extract_strided_slice %5 {offsets = [16, 0], sizes = [16, 32], strides = [1, 1]} : vector<64x32xf32> to vector<16x32xf32>
    %54 = vector.broadcast %41 : vector<16x1xf32> to vector<16x32xf32>
    %55 = arith.mulf %53, %54 : vector<16x32xf32>
    %56 = vector.broadcast %44 : vector<16x1xf32> to vector<16x32xf32>
    %57 = arith.addf %55, %56 : vector<16x32xf32>
    %cst_20 = arith.constant 0.000000e+00 : f32
    %58 = vector.broadcast %cst_20 : f32 to vector<16x32xf32>
    %59 = arith.maximumf %57, %58 : vector<16x32xf32>
    %c16 = arith.constant 16 : index
    %c0_21 = arith.constant 0 : index
    %60 = vector.load %arg5[%c16, %c0_21] : memref<64x32xf32, #tpu.memory_space<vmem>>, vector<16x32xf32>
    tpu.vector_store %arg5[%c16, %c0_21], %59 {strides = array<i32>} : memref<64x32xf32, #tpu.memory_space<vmem>>, vector<16x32xf32>,
    %61 = vector.extract_strided_slice %5 {offsets = [32, 0], sizes = [16, 32], strides = [1, 1]} : vector<64x32xf32> to vector<16x32xf32>
    %62 = vector.broadcast %41 : vector<16x1xf32> to vector<16x32xf32>
    %63 = arith.mulf %61, %62 : vector<16x32xf32>
    %64 = vector.broadcast %44 : vector<16x1xf32> to vector<16x32xf32>
    %65 = arith.addf %63, %64 : vector<16x32xf32>
    %cst_22 = arith.constant 0.000000e+00 : f32
    %66 = vector.broadcast %cst_22 : f32 to vector<16x32xf32>
    %67 = arith.maximumf %65, %66 : vector<16x32xf32>
    %c32 = arith.constant 32 : index
    %c0_23 = arith.constant 0 : index
    %68 = vector.load %arg5[%c32, %c0_23] : memref<64x32xf32, #tpu.memory_space<vmem>>, vector<16x32xf32>
    tpu.vector_store %arg5[%c32, %c0_23], %67 {strides = array<i32>} : memref<64x32xf32, #tpu.memory_space<vmem>>, vector<16x32xf32>,
    %69 = vector.extract_strided_slice %5 {offsets = [48, 0], sizes = [16, 32], strides = [1, 1]} : vector<64x32xf32> to vector<16x32xf32>
    %70 = vector.broadcast %41 : vector<16x1xf32> to vector<16x32xf32>
    %71 = arith.mulf %69, %70 : vector<16x32xf32>
    %72 = vector.broadcast %44 : vector<16x1xf32> to vector<16x32xf32>
    %73 = arith.addf %71, %72 : vector<16x32xf32>
    %cst_24 = arith.constant 0.000000e+00 : f32
    %74 = vector.broadcast %cst_24 : f32 to vector<16x32xf32>
    %75 = arith.maximumf %73, %74 : vector<16x32xf32>
    %c48 = arith.constant 48 : index
    %c0_25 = arith.constant 0 : index
    %76 = vector.load %arg5[%c48, %c0_25] : memref<64x32xf32, #tpu.memory_space<vmem>>, vector<16x32xf32>
    tpu.vector_store %arg5[%c48, %c0_25], %75 {strides = array<i32>} : memref<64x32xf32, #tpu.memory_space<vmem>>, vector<16x32xf32>,
    return
  }
}

module attributes {stable_mosaic.version = 11 : i64} {
  func.func @_conv_bn_relu_kernel(%arg0: memref<64x128xbf16, #tpu.memory_space<vmem>>, %arg1: memref<128x64xbf16, #tpu.memory_space<vmem>>, %arg2: memref<128x1xf32, #tpu.memory_space<vmem>>, %arg3: memref<32x1xf32, #tpu.memory_space<vmem>>, %arg4: memref<32x1xf32, #tpu.memory_space<vmem>>, %arg5: memref<128x128xf32, #tpu.memory_space<vmem>>) attributes {dimension_semantics = [], scalar_prefetch = 0 : i64, scratch_operands = 0 : i64, tpu.core_type = #tpu.core_type<tc>} {
    %c0 = arith.constant 0 : index
    %c0_0 = arith.constant 0 : index
    %0 = vector.load %arg1[%c0, %c0_0] : memref<128x64xbf16, #tpu.memory_space<vmem>>, vector<128x64xbf16>
    %c0_1 = arith.constant 0 : index
    %c0_2 = arith.constant 0 : index
    %1 = vector.load %arg0[%c0_1, %c0_2] : memref<64x128xbf16, #tpu.memory_space<vmem>>, vector<64x128xbf16>
    %cst = arith.constant dense<0.000000e+00> : vector<128x128xf32>
    %2 = tpu.matmul %0, %1, %cst {dimension_numbers = #tpu.dot_dimension_numbers<[1], [0], [0], [1], [0, 0, 1, 1], [], []>} : vector<128x64xbf16>, vector<64x128xbf16>, vector<128x128xf32> -> vector<128x128xf32>
    %c0_3 = arith.constant 0 : index
    %c0_4 = arith.constant 0 : index
    %3 = vector.load %arg2[%c0_3, %c0_4] : memref<128x1xf32, #tpu.memory_space<vmem>>, vector<128x1xf32>
    %4 = vector.broadcast %3 : vector<128x1xf32> to vector<128x128xf32>
    %5 = arith.addf %2, %4 : vector<128x128xf32>
    %cst_5 = arith.constant dense<0.000000e+00> : vector<128xf32>
    %6 = vector.multi_reduction <add>, %5, %cst_5 [1] : vector<128x128xf32> to vector<128xf32>
    %7 = vector.shape_cast %6 : vector<128xf32> to vector<128x1xf32>
    %8 = arith.mulf %5, %5 : vector<128x128xf32>
    %cst_6 = arith.constant dense<0.000000e+00> : vector<128xf32>
    %9 = vector.multi_reduction <add>, %8, %cst_6 [1] : vector<128x128xf32> to vector<128xf32>
    %10 = vector.shape_cast %9 : vector<128xf32> to vector<128x1xf32>
    %11 = vector.extract_strided_slice %7 {offsets = [0, 0], sizes = [32, 1], strides = [1, 1]} : vector<128x1xf32> to vector<32x1xf32>
    %cst_7 = arith.constant 0.000000e+00 : f32
    %12 = vector.broadcast %cst_7 : f32 to vector<32x1xf32>
    %13 = arith.addf %12, %11 : vector<32x1xf32>
    %14 = vector.extract_strided_slice %7 {offsets = [32, 0], sizes = [32, 1], strides = [1, 1]} : vector<128x1xf32> to vector<32x1xf32>
    %15 = arith.addf %13, %14 : vector<32x1xf32>
    %16 = vector.extract_strided_slice %7 {offsets = [64, 0], sizes = [32, 1], strides = [1, 1]} : vector<128x1xf32> to vector<32x1xf32>
    %17 = arith.addf %15, %16 : vector<32x1xf32>
    %18 = vector.extract_strided_slice %7 {offsets = [96, 0], sizes = [32, 1], strides = [1, 1]} : vector<128x1xf32> to vector<32x1xf32>
    %19 = arith.addf %17, %18 : vector<32x1xf32>
    %20 = vector.extract_strided_slice %10 {offsets = [0, 0], sizes = [32, 1], strides = [1, 1]} : vector<128x1xf32> to vector<32x1xf32>
    %cst_8 = arith.constant 0.000000e+00 : f32
    %21 = vector.broadcast %cst_8 : f32 to vector<32x1xf32>
    %22 = arith.addf %21, %20 : vector<32x1xf32>
    %23 = vector.extract_strided_slice %10 {offsets = [32, 0], sizes = [32, 1], strides = [1, 1]} : vector<128x1xf32> to vector<32x1xf32>
    %24 = arith.addf %22, %23 : vector<32x1xf32>
    %25 = vector.extract_strided_slice %10 {offsets = [64, 0], sizes = [32, 1], strides = [1, 1]} : vector<128x1xf32> to vector<32x1xf32>
    %26 = arith.addf %24, %25 : vector<32x1xf32>
    %27 = vector.extract_strided_slice %10 {offsets = [96, 0], sizes = [32, 1], strides = [1, 1]} : vector<128x1xf32> to vector<32x1xf32>
    %28 = arith.addf %26, %27 : vector<32x1xf32>
    %cst_9 = arith.constant 0.001953125 : f32
    %29 = vector.broadcast %cst_9 : f32 to vector<32x1xf32>
    %30 = arith.mulf %19, %29 : vector<32x1xf32>
    %cst_10 = arith.constant 0.001953125 : f32
    %31 = vector.broadcast %cst_10 : f32 to vector<32x1xf32>
    %32 = arith.mulf %28, %31 : vector<32x1xf32>
    %33 = arith.mulf %30, %30 : vector<32x1xf32>
    %34 = arith.subf %32, %33 : vector<32x1xf32>
    %cst_11 = arith.constant 0.000000e+00 : f32
    %35 = vector.broadcast %cst_11 : f32 to vector<32x1xf32>
    %36 = arith.maximumf %34, %35 : vector<32x1xf32>
    %cst_12 = arith.constant 9.99999974E-6 : f32
    %37 = vector.broadcast %cst_12 : f32 to vector<32x1xf32>
    %38 = arith.addf %36, %37 : vector<32x1xf32>
    %39 = math.rsqrt %38 : vector<32x1xf32>
    %c0_13 = arith.constant 0 : index
    %c0_14 = arith.constant 0 : index
    %40 = vector.load %arg3[%c0_13, %c0_14] : memref<32x1xf32, #tpu.memory_space<vmem>>, vector<32x1xf32>
    %41 = arith.mulf %40, %39 : vector<32x1xf32>
    %c0_15 = arith.constant 0 : index
    %c0_16 = arith.constant 0 : index
    %42 = vector.load %arg4[%c0_15, %c0_16] : memref<32x1xf32, #tpu.memory_space<vmem>>, vector<32x1xf32>
    %43 = arith.mulf %30, %41 : vector<32x1xf32>
    %44 = arith.subf %42, %43 : vector<32x1xf32>
    %45 = vector.extract_strided_slice %5 {offsets = [0, 0], sizes = [32, 128], strides = [1, 1]} : vector<128x128xf32> to vector<32x128xf32>
    %46 = vector.broadcast %41 : vector<32x1xf32> to vector<32x128xf32>
    %47 = arith.mulf %45, %46 : vector<32x128xf32>
    %48 = vector.broadcast %44 : vector<32x1xf32> to vector<32x128xf32>
    %49 = arith.addf %47, %48 : vector<32x128xf32>
    %cst_17 = arith.constant 0.000000e+00 : f32
    %50 = vector.broadcast %cst_17 : f32 to vector<32x128xf32>
    %51 = arith.maximumf %49, %50 : vector<32x128xf32>
    %c0_18 = arith.constant 0 : index
    %c0_19 = arith.constant 0 : index
    %52 = vector.load %arg5[%c0_18, %c0_19] : memref<128x128xf32, #tpu.memory_space<vmem>>, vector<32x128xf32>
    tpu.vector_store %arg5[%c0_18, %c0_19], %51 {strides = array<i32>} : memref<128x128xf32, #tpu.memory_space<vmem>>, vector<32x128xf32>,
    %53 = vector.extract_strided_slice %5 {offsets = [32, 0], sizes = [32, 128], strides = [1, 1]} : vector<128x128xf32> to vector<32x128xf32>
    %54 = vector.broadcast %41 : vector<32x1xf32> to vector<32x128xf32>
    %55 = arith.mulf %53, %54 : vector<32x128xf32>
    %56 = vector.broadcast %44 : vector<32x1xf32> to vector<32x128xf32>
    %57 = arith.addf %55, %56 : vector<32x128xf32>
    %cst_20 = arith.constant 0.000000e+00 : f32
    %58 = vector.broadcast %cst_20 : f32 to vector<32x128xf32>
    %59 = arith.maximumf %57, %58 : vector<32x128xf32>
    %c32 = arith.constant 32 : index
    %c0_21 = arith.constant 0 : index
    %60 = vector.load %arg5[%c32, %c0_21] : memref<128x128xf32, #tpu.memory_space<vmem>>, vector<32x128xf32>
    tpu.vector_store %arg5[%c32, %c0_21], %59 {strides = array<i32>} : memref<128x128xf32, #tpu.memory_space<vmem>>, vector<32x128xf32>,
    %61 = vector.extract_strided_slice %5 {offsets = [64, 0], sizes = [32, 128], strides = [1, 1]} : vector<128x128xf32> to vector<32x128xf32>
    %62 = vector.broadcast %41 : vector<32x1xf32> to vector<32x128xf32>
    %63 = arith.mulf %61, %62 : vector<32x128xf32>
    %64 = vector.broadcast %44 : vector<32x1xf32> to vector<32x128xf32>
    %65 = arith.addf %63, %64 : vector<32x128xf32>
    %cst_22 = arith.constant 0.000000e+00 : f32
    %66 = vector.broadcast %cst_22 : f32 to vector<32x128xf32>
    %67 = arith.maximumf %65, %66 : vector<32x128xf32>
    %c64 = arith.constant 64 : index
    %c0_23 = arith.constant 0 : index
    %68 = vector.load %arg5[%c64, %c0_23] : memref<128x128xf32, #tpu.memory_space<vmem>>, vector<32x128xf32>
    tpu.vector_store %arg5[%c64, %c0_23], %67 {strides = array<i32>} : memref<128x128xf32, #tpu.memory_space<vmem>>, vector<32x128xf32>,
    %69 = vector.extract_strided_slice %5 {offsets = [96, 0], sizes = [32, 128], strides = [1, 1]} : vector<128x128xf32> to vector<32x128xf32>
    %70 = vector.broadcast %41 : vector<32x1xf32> to vector<32x128xf32>
    %71 = arith.mulf %69, %70 : vector<32x128xf32>
    %72 = vector.broadcast %44 : vector<32x1xf32> to vector<32x128xf32>
    %73 = arith.addf %71, %72 : vector<32x128xf32>
    %cst_24 = arith.constant 0.000000e+00 : f32
    %74 = vector.broadcast %cst_24 : f32 to vector<32x128xf32>
    %75 = arith.maximumf %73, %74 : vector<32x128xf32>
    %c96 = arith.constant 96 : index
    %c0_25 = arith.constant 0 : index
    %76 = vector.load %arg5[%c96, %c0_25] : memref<128x128xf32, #tpu.memory_space<vmem>>, vector<32x128xf32>
    tpu.vector_store %arg5[%c96, %c0_25], %75 {strides = array<i32>} : memref<128x128xf32, #tpu.memory_space<vmem>>, vector<32x128xf32>,
    return
  }
}

module attributes {stable_mosaic.version = 11 : i64} {
  func.func @_conv_tanh_kernel(%arg0: memref<128x512xbf16, #tpu.memory_space<vmem>>, %arg1: memref<12x128xbf16, #tpu.memory_space<vmem>>, %arg2: memref<12x1xf32, #tpu.memory_space<vmem>>, %arg3: memref<12x512xf32, #tpu.memory_space<vmem>>) attributes {dimension_semantics = [], scalar_prefetch = 0 : i64, scratch_operands = 0 : i64, tpu.core_type = #tpu.core_type<tc>} {
    %c0 = arith.constant 0 : index
    %c0_0 = arith.constant 0 : index
    %0 = vector.load %arg1[%c0, %c0_0] : memref<12x128xbf16, #tpu.memory_space<vmem>>, vector<12x128xbf16>
    %c0_1 = arith.constant 0 : index
    %c0_2 = arith.constant 0 : index
    %1 = vector.load %arg0[%c0_1, %c0_2] : memref<128x512xbf16, #tpu.memory_space<vmem>>, vector<128x512xbf16>
    %cst = arith.constant dense<0.000000e+00> : vector<12x512xf32>
    %2 = tpu.matmul %0, %1, %cst {dimension_numbers = #tpu.dot_dimension_numbers<[1], [0], [0], [1], [0, 0, 1, 1], [], []>} : vector<12x128xbf16>, vector<128x512xbf16>, vector<12x512xf32> -> vector<12x512xf32>
    %c0_3 = arith.constant 0 : index
    %c0_4 = arith.constant 0 : index
    %3 = vector.load %arg2[%c0_3, %c0_4] : memref<12x1xf32, #tpu.memory_space<vmem>>, vector<12x1xf32>
    %4 = vector.broadcast %3 : vector<12x1xf32> to vector<12x512xf32>
    %5 = arith.addf %2, %4 : vector<12x512xf32>
    %6 = math.tanh %5 : vector<12x512xf32>
    %c0_5 = arith.constant 0 : index
    %c0_6 = arith.constant 0 : index
    %7 = vector.load %arg3[%c0_5, %c0_6] : memref<12x512xf32, #tpu.memory_space<vmem>>, vector<12x512xf32>
    tpu.vector_store %arg3[%c0_5, %c0_6], %6 {strides = array<i32>} : memref<12x512xf32, #tpu.memory_space<vmem>>, vector<12x512xf32>,
    return
  }
}

</mosaic_0001>

<llo_original>
// kernel: autoencoder_forward.7
$region0: #{autoencoder_forward.7}
  #allocation0 [shape = 'u32[]', space=smem, size = 0x4, offset = 0x4, fixed_abs, tag = 'smem constant byte address 0x4 - core index']
  #allocation1 [shape = 'u32[72,128]{1,0:T(1,128)}', space=vmem, size = 0x9000, scoped, tag = 'internal scratch']
  %s0 = inlined_call_operand.vmem [shape: bf16[27,512], index: 0, kind: input, shape index: {}]
  %s1 = inlined_call_operand.vmem [shape: bf16[32,27], index: 1, kind: input, shape index: {}]
  %s2 = inlined_call_operand.vmem [shape: f32[32,1], index: 2, kind: input, shape index: {}]
  %s3 = inlined_call_operand.vmem [shape: f32[32,1], index: 3, kind: input, shape index: {}]
  %s4 = inlined_call_operand.vmem [shape: f32[32,1], index: 4, kind: input, shape index: {}]
  %s5 = inlined_call_operand.vmem [shape: f32[32,512], index: 5, kind: output, shape index: {}]
  %s6 = sld [smem:[#allocation0]]
  $region30: #{autoencoder_forward.7} parent=0
    _
  %s8 = ssub.s32 1, %s6
  %s9 = scalar_select 0, %s8, %s6
  // Predicated region
  $region2: #{autoencoder_forward.7} parent=0 // pred_check
    _
  $region3: #{autoencoder_forward.7} parent=0 // pred_check_branch
    %11 = sbr.rel (0) target = $region5
  $region4: #{autoencoder_forward.7} parent=0 // pred_region
    _
  $region5: #{autoencoder_forward.7} parent=0 // pred_fallthru
    _
  // Predicated region
  $region6: #{autoencoder_forward.7} parent=0 // pred_check
    _
  $region7: #{autoencoder_forward.7} parent=0 // pred_check_branch
    %13 = sbr.rel (0) target = $region9
  $region8: #{autoencoder_forward.7} parent=0 // pred_region
    _
  $region9: #{autoencoder_forward.7} parent=0 // pred_fallthru
    _
  // Predicated region
  $region10: #{autoencoder_forward.7} parent=0 // pred_check
    _
  $region11: #{autoencoder_forward.7} parent=0 // pred_check_branch
    %15 = sbr.rel (0) target = $region13
  $region12: #{autoencoder_forward.7} parent=0 // pred_region
    _
  $region13: #{autoencoder_forward.7} parent=0 // pred_fallthru
    _
  // Predicated region
  $region14: #{autoencoder_forward.7} parent=0 // pred_check
    _
  $region15: #{autoencoder_forward.7} parent=0 // pred_check_branch
    %17 = sbr.rel (0) target = $region17
  $region16: #{autoencoder_forward.7} parent=0 // pred_region
    _
  $region17: #{autoencoder_forward.7} parent=0 // pred_fallthru
    _
  // Predicated region
  $region18: #{autoencoder_forward.7} parent=0 // pred_check
    _
  $region19: #{autoencoder_forward.7} parent=0 // pred_check_branch
    %19 = sbr.rel (0) target = $region21
  $region20: #{autoencoder_forward.7} parent=0 // pred_region
    _
  $region21: #{autoencoder_forward.7} parent=0 // pred_fallthru
    _
  %v21 = vld [vmem:[%s1] sm:$0xf]
  %v22 = vld [vmem:[%s1 + $0x4] sm:$0xf]
  %v23 = vld [vmem:[%s1 + $0x8] sm:$0xf]
  %v24 = vld [vmem:[%s1 + $0xc] sm:$0xf]
  %v25 = vld [vmem:[%s0] sm:$0xff]
  %v26 = vld [vmem:[%s0 + $0x8] sm:$0xff]
  %v27 = vld [vmem:[%s0 + $0x10] sm:$0xff]
  %v28 = vld [vmem:[%s0 + $0x18] sm:$0xff]
  %v29 = vld [vmem:[%s0 + $0x20] sm:$0xff]
  %v30 = vld [vmem:[%s0 + $0x28] sm:$0xff]
  %v31 = vld [vmem:[%s0 + $0x30] sm:$0x33]
  %v32 = vld [vmem:[%s0 + $0x38] sm:$0x33]
  %v33 = vld [vmem:[%s2] sm:$0xff]
  %v34 = vld [vmem:[%s2 + $0x8] sm:$0xff]
  %v35 = vld [vmem:[%s2 + $0x10] sm:$0xff]
  %v36 = vld [vmem:[%s2 + $0x18] sm:$0xff]
  %38 = vset.pattern.permute.xlu0 0
  %39 = vperm.xlu0 %38, %v33
  %v40 = vpop.permute.xlu0 %39
  %43 = vset.pattern.permute.xlu0 0
  %44 = vperm.xlu0 %43, %v34
  %v45 = vpop.permute.xlu0 %44
  %48 = vset.pattern.permute.xlu0 0
  %49 = vperm.xlu0 %48, %v35
  %v50 = vpop.permute.xlu0 %49
  %53 = vset.pattern.permute.xlu0 0
  %54 = vperm.xlu0 %53, %v36
  %v55 = vpop.permute.xlu0 %54
  %v61 = vunpack.c.l.b16 %v21
  %v62 = vunpack.c.l.b16 %v22
  %v63 = vunpack.c.l.b16 %v23
  %v64 = vunpack.c.l.b16 %v24
  %v65 = vpack.c.b16 %v62, %v61
  %v66 = vpack.c.b16 %v64, %v63
  %v75 = vunpack.c.l.b16 %v25
  %v76 = vunpack.c.h.b16 %v25
  %v77 = vunpack.c.l.b16 %v26
  %v78 = vunpack.c.h.b16 %v26
  %v79 = vunpack.c.l.b16 %v27
  %v80 = vunpack.c.h.b16 %v27
  %v81 = vunpack.c.l.b16 %v28
  %v82 = vunpack.c.h.b16 %v28
  %v83 = vunpack.c.l.b16 %v29
  %v84 = vunpack.c.h.b16 %v29
  %v85 = vunpack.c.l.b16 %v30
  %v86 = vunpack.c.h.b16 %v30
  %v87 = vunpack.c.l.b16 %v31
  %v88 = vunpack.c.h.b16 %v31
  %v89 = vunpack.c.l.b16 %v32
  %v90 = vunpack.c.h.b16 %v32
  %v91 = vpack.c.b16 %v79, %v75
  %v92 = vpack.c.b16 %v80, %v76
  %v93 = vpack.c.b16 %v81, %v77
  %v94 = vpack.c.b16 %v82, %v78
  %v95 = vpack.c.b16 %v87, %v83
  %v96 = vpack.c.b16 %v88, %v84
  %v97 = vpack.c.b16 %v89, %v85
  %v98 = vpack.c.b16 %v90, %v86
  %vm103 = vcmask 220160
  %v105 = vsel %vm103, %v65, 0
  %v108 = vsel %vm103, %v66, 0
  %vm110 = vcmask 1044480
  %vm111 = vcmask 1045504
  %v112 = vsel %vm110, 4294967295, 65535
  %v113 = vsel %vm111, %v112, 0
  %v115 = vand.u32 %v95, %v113
  %v118 = vand.u32 %v96, %v113
  %v121 = vand.u32 %v97, %v113
  %v124 = vand.u32 %v98, %v113
  %126 = vmatpush.bf16.msra.mxu0 0
  %127 = vmatpush.bf16.msra.mxu0 0
  %128 = vmatpush.bf16.msra.mxu0 0
  %129 = vmatpush.bf16.msra.mxu0 0
  %130 = vmatpush.bf16.msra.mxu0 0
  %131 = vmatpush.bf16.msra.mxu0 0
  %132 = vmatpush.bf16.msra.mxu0 %v115
  %133 = vmatpush.bf16.msra.mxu0 %v91
  %134 = vmatmul.bf16.gmra.mxu0 %v105
  %v135 = vpop.f32.mrf.mxu0
  %v136 = vadd.f32 %v40, %v135
  %v137 = vpop.f32.mrf.mxu0
  %v138 = vadd.f32 %v45, %v137
  %139 = vmatmul.bf16.gmra.mxu0 %v108
  %v140 = vpop.f32.mrf.mxu0
  %v141 = vadd.f32 %v50, %v140
  %v142 = vpop.f32.mrf.mxu0
  %v143 = vadd.f32 %v55, %v142
  %144 = vdwg.mxu0
  %145 = vmatpush.bf16.msra.mxu0 0
  %146 = vmatpush.bf16.msra.mxu0 0
  %147 = vmatpush.bf16.msra.mxu0 0
  %148 = vmatpush.bf16.msra.mxu0 0
  %149 = vmatpush.bf16.msra.mxu0 0
  %150 = vmatpush.bf16.msra.mxu0 0
  %151 = vmatpush.bf16.msra.mxu0 %v118
  %152 = vmatpush.bf16.msra.mxu0 %v92
  %153 = vmatmul.bf16.gmra.mxu0 %v105
  %v154 = vpop.f32.mrf.mxu0
  %v155 = vadd.f32 %v40, %v154
  %v156 = vpop.f32.mrf.mxu0
  %v157 = vadd.f32 %v45, %v156
  %158 = vmatmul.bf16.gmra.mxu0 %v108
  %v159 = vpop.f32.mrf.mxu0
  %v160 = vadd.f32 %v50, %v159
  %v161 = vpop.f32.mrf.mxu0
  %v162 = vadd.f32 %v55, %v161
  %163 = vdwg.mxu0
  %164 = vmatpush.bf16.msra.mxu0 0
  %165 = vmatpush.bf16.msra.mxu0 0
  %166 = vmatpush.bf16.msra.mxu0 0
  %167 = vmatpush.bf16.msra.mxu0 0
  %168 = vmatpush.bf16.msra.mxu0 0
  %169 = vmatpush.bf16.msra.mxu0 0
  %170 = vmatpush.bf16.msra.mxu0 %v121
  %171 = vmatpush.bf16.msra.mxu0 %v93
  %172 = vmatmul.bf16.gmra.mxu0 %v105
  %v173 = vpop.f32.mrf.mxu0
  %v174 = vadd.f32 %v40, %v173
  %v175 = vpop.f32.mrf.mxu0
  %v176 = vadd.f32 %v45, %v175
  %177 = vmatmul.bf16.gmra.mxu0 %v108
  %v178 = vpop.f32.mrf.mxu0
  %v179 = vadd.f32 %v50, %v178
  %v180 = vpop.f32.mrf.mxu0
  %v181 = vadd.f32 %v55, %v180
  %182 = vdwg.mxu0
  %183 = vmatpush.bf16.msra.mxu0 0
  %184 = vmatpush.bf16.msra.mxu0 0
  %185 = vmatpush.bf16.msra.mxu0 0
  %186 = vmatpush.bf16.msra.mxu0 0
  %187 = vmatpush.bf16.msra.mxu0 0
  %188 = vmatpush.bf16.msra.mxu0 0
  %189 = vmatpush.bf16.msra.mxu0 %v124
  %190 = vmatpush.bf16.msra.mxu0 %v94
  %191 = vmatmul.bf16.gmra.mxu0 %v105
  %v192 = vpop.f32.mrf.mxu0
  %v193 = vadd.f32 %v40, %v192
  %v194 = vpop.f32.mrf.mxu0
  %v195 = vadd.f32 %v45, %v194
  %196 = vmatmul.bf16.gmra.mxu0 %v108
  %v197 = vpop.f32.mrf.mxu0
  %v198 = vadd.f32 %v50, %v197
  %v199 = vpop.f32.mrf.mxu0
  %v200 = vadd.f32 %v55, %v199
  %201 = vdwg.mxu0
  %v202 = vadd.f32 %v136, %v155
  %v203 = vadd.f32 %v202, %v174
  %v204 = vadd.f32 %v203, %v193
  %205 = vadd.xlane.f32.xlu0 %v204
  %v206 = vpop.xlane.xlu0 %205
  %v207 = vadd.f32 %v138, %v157
  %v208 = vadd.f32 %v207, %v176
  %v209 = vadd.f32 %v208, %v195
  %210 = vadd.xlane.f32.xlu0 %v209
  %v211 = vpop.xlane.xlu0 %210
  %v212 = vadd.f32 %v141, %v160
  %v213 = vadd.f32 %v212, %v179
  %v214 = vadd.f32 %v213, %v198
  %215 = vadd.xlane.f32.xlu0 %v214
  %v216 = vpop.xlane.xlu0 %215
  %v217 = vadd.f32 %v143, %v162
  %v218 = vadd.f32 %v217, %v181
  %v219 = vadd.f32 %v218, %v200
  %220 = vadd.xlane.f32.xlu0 %v219
  %v221 = vpop.xlane.xlu0 %220
  %v222 = vmul.f32 %v136, %v136
  %v223 = vmul.f32 %v155, %v155
  %v224 = vmul.f32 %v174, %v174
  %v225 = vmul.f32 %v193, %v193
  %v226 = vmul.f32 %v138, %v138
  %v227 = vmul.f32 %v157, %v157
  %v228 = vmul.f32 %v176, %v176
  %v229 = vmul.f32 %v195, %v195
  %v230 = vmul.f32 %v141, %v141
  %v231 = vmul.f32 %v160, %v160
  %v232 = vmul.f32 %v179, %v179
  %v233 = vmul.f32 %v198, %v198
  %v234 = vmul.f32 %v143, %v143
  %v235 = vmul.f32 %v162, %v162
  %v236 = vmul.f32 %v181, %v181
  %v237 = vmul.f32 %v200, %v200
  %v238 = vadd.f32 %v222, %v223
  %v239 = vadd.f32 %v238, %v224
  %v240 = vadd.f32 %v239, %v225
  %241 = vadd.xlane.f32.xlu0 %v240
  %v242 = vpop.xlane.xlu0 %241
  %v243 = vadd.f32 %v226, %v227
  %v244 = vadd.f32 %v243, %v228
  %v245 = vadd.f32 %v244, %v229
  %246 = vadd.xlane.f32.xlu0 %v245
  %v247 = vpop.xlane.xlu0 %246
  %v248 = vadd.f32 %v230, %v231
  %v249 = vadd.f32 %v248, %v232
  %v250 = vadd.f32 %v249, %v233
  %251 = vadd.xlane.f32.xlu0 %v250
  %v252 = vpop.xlane.xlu0 %251
  %v253 = vadd.f32 %v234, %v235
  %v254 = vadd.f32 %v253, %v236
  %v255 = vadd.f32 %v254, %v237
  %256 = vadd.xlane.f32.xlu0 %v255
  %v257 = vpop.xlane.xlu0 %256
  %v258 = vadd.f32 %v206, 0.0
  %v259 = vadd.f32 %v211, 0.0
  %v260 = vadd.f32 %v216, 0.0
  %v261 = vadd.f32 %v221, 0.0
  %v262 = vadd.f32 %v242, 0.0
  %v263 = vadd.f32 %v247, 0.0
  %v264 = vadd.f32 %v252, 0.0
  %v265 = vadd.f32 %v257, 0.0
  %v266 = vmul.f32 %v258, 0.001953125
  %v267 = vmul.f32 %v259, 0.001953125
  %v268 = vmul.f32 %v260, 0.001953125
  %v269 = vmul.f32 %v261, 0.001953125
  %v270 = vmul.f32 %v262, 0.001953125
  %v271 = vmul.f32 %v263, 0.001953125
  %v272 = vmul.f32 %v264, 0.001953125
  %v273 = vmul.f32 %v265, 0.001953125
  %v274 = vmul.f32 %v266, %v266
  %v275 = vmul.f32 %v267, %v267
  %v276 = vmul.f32 %v268, %v268
  %v277 = vmul.f32 %v269, %v269
  %v278 = vsub.f32 %v270, %v274
  %v279 = vsub.f32 %v271, %v275
  %v280 = vsub.f32 %v272, %v276
  %v281 = vsub.f32 %v273, %v277
  %v282 = vmax.f32 %v278, 0.0
  %v283 = vmax.f32 %v279, 0.0
  %v284 = vmax.f32 %v280, 0.0
  %v285 = vmax.f32 %v281, 0.0
  %v286 = vadd.f32 %v282, 1e-05
  %v287 = vadd.f32 %v283, 1e-05
  %v288 = vadd.f32 %v284, 1e-05
  %v289 = vadd.f32 %v285, 1e-05
  %v290 = vrsqrt.pop %v286
  %v291 = vmul.f32 %v290, %v286
  %v292 = vmul.f32 %v291, %v290
  %v293 = vmul.f32 0.5, %v292
  %v294 = vsub.f32 1.5, %v293
  %v295 = vmul.f32 %v290, %v294
  %vm296 = vweird.f32 %v286
  %vm297 = vweird.f32 %v290
  %vm298 = vmor %vm296, %vm297
  %v299 = vsel %vm298, %v290, %v295
  %v300 = vrsqrt.pop %v287
  %v301 = vmul.f32 %v300, %v287
  %v302 = vmul.f32 %v301, %v300
  %v303 = vmul.f32 0.5, %v302
  %v304 = vsub.f32 1.5, %v303
  %v305 = vmul.f32 %v300, %v304
  %vm306 = vweird.f32 %v287
  %vm307 = vweird.f32 %v300
  %vm308 = vmor %vm306, %vm307
  %v309 = vsel %vm308, %v300, %v305
  %v310 = vrsqrt.pop %v288
  %v311 = vmul.f32 %v310, %v288
  %v312 = vmul.f32 %v311, %v310
  %v313 = vmul.f32 0.5, %v312
  %v314 = vsub.f32 1.5, %v313
  %v315 = vmul.f32 %v310, %v314
  %vm316 = vweird.f32 %v288
  %vm317 = vweird.f32 %v310
  %vm318 = vmor %vm316, %vm317
  %v319 = vsel %vm318, %v310, %v315
  %v320 = vrsqrt.pop %v289
  %v321 = vmul.f32 %v320, %v289
  %v322 = vmul.f32 %v321, %v320
  %v323 = vmul.f32 0.5, %v322
  %v324 = vsub.f32 1.5, %v323
  %v325 = vmul.f32 %v320, %v324
  %vm326 = vweird.f32 %v289
  %vm327 = vweird.f32 %v320
  %vm328 = vmor %vm326, %vm327
  %v329 = vsel %vm328, %v320, %v325
  %v330 = vld [vmem:[%s3] sm:$0xff]
  %v331 = vld [vmem:[%s3 + $0x8] sm:$0xff]
  %v332 = vld [vmem:[%s3 + $0x10] sm:$0xff]
  %v333 = vld [vmem:[%s3 + $0x18] sm:$0xff]
  %v334 = vmul.f32 %v330, %v299
  %v335 = vmul.f32 %v331, %v309
  %v336 = vmul.f32 %v332, %v319
  %v337 = vmul.f32 %v333, %v329
  %v338 = vld [vmem:[%s4] sm:$0xff]
  %v339 = vld [vmem:[%s4 + $0x8] sm:$0xff]
  %v340 = vld [vmem:[%s4 + $0x10] sm:$0xff]
  %v341 = vld [vmem:[%s4 + $0x18] sm:$0xff]
  %v342 = vmul.f32 %v266, %v334
  %v343 = vmul.f32 %v267, %v335
  %v344 = vmul.f32 %v268, %v336
  %v345 = vmul.f32 %v269, %v337
  %v346 = vsub.f32 %v338, %v342
  %v347 = vsub.f32 %v339, %v343
  %v348 = vsub.f32 %v340, %v344
  %v349 = vsub.f32 %v341, %v345
  %351 = vset.pattern.permute.xlu0 0
  %352 = vperm.xlu0 %351, %v334
  %v353 = vpop.permute.xlu0 %352
  %356 = vset.pattern.permute.xlu0 0
  %357 = vperm.xlu0 %356, %v335
  %v358 = vpop.permute.xlu0 %357
  %361 = vset.pattern.permute.xlu0 0
  %362 = vperm.xlu0 %361, %v336
  %v363 = vpop.permute.xlu0 %362
  %366 = vset.pattern.permute.xlu0 0
  %367 = vperm.xlu0 %366, %v337
  %v368 = vpop.permute.xlu0 %367
  %v370 = vmul.f32 %v136, %v353
  %v371 = vmul.f32 %v155, %v353
  %v372 = vmul.f32 %v174, %v353
  %v373 = vmul.f32 %v193, %v353
  %v374 = vmul.f32 %v138, %v358
  %v375 = vmul.f32 %v157, %v358
  %v376 = vmul.f32 %v176, %v358
  %v377 = vmul.f32 %v195, %v358
  %v378 = vmul.f32 %v141, %v363
  %v379 = vmul.f32 %v160, %v363
  %v380 = vmul.f32 %v179, %v363
  %v381 = vmul.f32 %v198, %v363
  %v382 = vmul.f32 %v143, %v368
  %v383 = vmul.f32 %v162, %v368
  %v384 = vmul.f32 %v181, %v368
  %v385 = vmul.f32 %v200, %v368
  %387 = vset.pattern.permute.xlu0 0
  %388 = vperm.xlu0 %387, %v346
  %v389 = vpop.permute.xlu0 %388
  %392 = vset.pattern.permute.xlu0 0
  %393 = vperm.xlu0 %392, %v347
  %v394 = vpop.permute.xlu0 %393
  %397 = vset.pattern.permute.xlu0 0
  %398 = vperm.xlu0 %397, %v348
  %v399 = vpop.permute.xlu0 %398
  %402 = vset.pattern.permute.xlu0 0
  %403 = vperm.xlu0 %402, %v349
  %v404 = vpop.permute.xlu0 %403
  %v406 = vadd.f32 %v370, %v389
  %v407 = vadd.f32 %v371, %v389
  %v408 = vadd.f32 %v372, %v389
  %v409 = vadd.f32 %v373, %v389
  %v410 = vadd.f32 %v374, %v394
  %v411 = vadd.f32 %v375, %v394
  %v412 = vadd.f32 %v376, %v394
  %v413 = vadd.f32 %v377, %v394
  %v414 = vadd.f32 %v378, %v399
  %v415 = vadd.f32 %v379, %v399
  %v416 = vadd.f32 %v380, %v399
  %v417 = vadd.f32 %v381, %v399
  %v418 = vadd.f32 %v382, %v404
  %v419 = vadd.f32 %v383, %v404
  %v420 = vadd.f32 %v384, %v404
  %v421 = vadd.f32 %v385, %v404
  %v422 = vmax.f32 %v406, 0.0
  %v423 = vmax.f32 %v407, 0.0
  %v424 = vmax.f32 %v408, 0.0
  %v425 = vmax.f32 %v409, 0.0
  %v426 = vmax.f32 %v410, 0.0
  %v427 = vmax.f32 %v411, 0.0
  %v428 = vmax.f32 %v412, 0.0
  %v429 = vmax.f32 %v413, 0.0
  %v430 = vmax.f32 %v414, 0.0
  %v431 = vmax.f32 %v415, 0.0
  %v432 = vmax.f32 %v416, 0.0
  %v433 = vmax.f32 %v417, 0.0
  %v434 = vmax.f32 %v418, 0.0
  %v435 = vmax.f32 %v419, 0.0
  %v436 = vmax.f32 %v420, 0.0
  %v437 = vmax.f32 %v421, 0.0
  %438 = vst [vmem:[%s5] sm:$0xff] %v422
  %439 = vst [vmem:[%s5 + $0x8] sm:$0xff] %v423
  %440 = vst [vmem:[%s5 + $0x10] sm:$0xff] %v424
  %441 = vst [vmem:[%s5 + $0x18] sm:$0xff] %v425
  %442 = vst [vmem:[%s5 + $0x20] sm:$0xff] %v426
  %443 = vst [vmem:[%s5 + $0x28] sm:$0xff] %v427
  %444 = vst [vmem:[%s5 + $0x30] sm:$0xff] %v428
  %445 = vst [vmem:[%s5 + $0x38] sm:$0xff] %v429
  %446 = vst [vmem:[%s5 + $0x40] sm:$0xff] %v430
  %447 = vst [vmem:[%s5 + $0x48] sm:$0xff] %v431
  %448 = vst [vmem:[%s5 + $0x50] sm:$0xff] %v432
  %449 = vst [vmem:[%s5 + $0x58] sm:$0xff] %v433
  %450 = vst [vmem:[%s5 + $0x60] sm:$0xff] %v434
  %451 = vst [vmem:[%s5 + $0x68] sm:$0xff] %v435
  %452 = vst [vmem:[%s5 + $0x70] sm:$0xff] %v436
  %453 = vst [vmem:[%s5 + $0x78] sm:$0xff] %v437
  // Predicated region
  $region22: #{autoencoder_forward.7} parent=0 // pred_check
    _
  $region23: #{autoencoder_forward.7} parent=0 // pred_check_branch
    %455 = sbr.rel (0) target = $region25
  $region24: #{autoencoder_forward.7} parent=0 // pred_region
    _
  $region25: #{autoencoder_forward.7} parent=0 // pred_fallthru
    _
  // Predicated region
  $region26: #{autoencoder_forward.7} parent=0 // pred_check
    _
  $region27: #{autoencoder_forward.7} parent=0 // pred_check_branch
    %457 = sbr.rel (0) target = $region29
  $region28: #{autoencoder_forward.7} parent=0 // pred_region
    _
  $region29: #{autoencoder_forward.7} parent=0 // pred_fallthru
    _

// kernel: autoencoder_forward.8
$region0: #{autoencoder_forward.8}
  #allocation0 [shape = 'u32[]', space=smem, size = 0x4, offset = 0x4, fixed_abs, tag = 'smem constant byte address 0x4 - core index']
  #allocation1 [shape = 'u32[72,128]{1,0:T(1,128)}', space=vmem, size = 0x9000, scoped, tag = 'internal scratch']
  %s0 = inlined_call_operand.vmem [shape: bf16[288,128], index: 0, kind: input, shape index: {}]
  %s1 = inlined_call_operand.vmem [shape: bf16[16,288], index: 1, kind: input, shape index: {}]
  %s2 = inlined_call_operand.vmem [shape: f32[16,1], index: 2, kind: input, shape index: {}]
  %s3 = inlined_call_operand.vmem [shape: f32[16,1], index: 3, kind: input, shape index: {}]
  %s4 = inlined_call_operand.vmem [shape: f32[16,1], index: 4, kind: input, shape index: {}]
  %s5 = inlined_call_operand.vmem [shape: f32[16,128], index: 5, kind: output, shape index: {}]
  %s6 = sld [smem:[#allocation0]]
  $region30: #{autoencoder_forward.8} parent=0
    _
  %s8 = ssub.s32 1, %s6
  %s9 = scalar_select 0, %s8, %s6
  // Predicated region
  $region2: #{autoencoder_forward.8} parent=0 // pred_check
    _
  $region3: #{autoencoder_forward.8} parent=0 // pred_check_branch
    %11 = sbr.rel (0) target = $region5
  $region4: #{autoencoder_forward.8} parent=0 // pred_region
    _
  $region5: #{autoencoder_forward.8} parent=0 // pred_fallthru
    _
  // Predicated region
  $region6: #{autoencoder_forward.8} parent=0 // pred_check
    _
  $region7: #{autoencoder_forward.8} parent=0 // pred_check_branch
    %13 = sbr.rel (0) target = $region9
  $region8: #{autoencoder_forward.8} parent=0 // pred_region
    _
  $region9: #{autoencoder_forward.8} parent=0 // pred_fallthru
    _
  // Predicated region
  $region10: #{autoencoder_forward.8} parent=0 // pred_check
    _
  $region11: #{autoencoder_forward.8} parent=0 // pred_check_branch
    %15 = sbr.rel (0) target = $region13
  $region12: #{autoencoder_forward.8} parent=0 // pred_region
    _
  $region13: #{autoencoder_forward.8} parent=0 // pred_fallthru
    _
  // Predicated region
  $region14: #{autoencoder_forward.8} parent=0 // pred_check
    _
  $region15: #{autoencoder_forward.8} parent=0 // pred_check_branch
    %17 = sbr.rel (0) target = $region17
  $region16: #{autoencoder_forward.8} parent=0 // pred_region
    _
  $region17: #{autoencoder_forward.8} parent=0 // pred_fallthru
    _
  // Predicated region
  $region18: #{autoencoder_forward.8} parent=0 // pred_check
    _
  $region19: #{autoencoder_forward.8} parent=0 // pred_check_branch
    %19 = sbr.rel (0) target = $region21
  $region20: #{autoencoder_forward.8} parent=0 // pred_region
    _
  $region21: #{autoencoder_forward.8} parent=0 // pred_fallthru
    _
  %v21 = vld [vmem:[%s1] sm:$0xff]
  %v22 = vld [vmem:[%s1 + $0x8] sm:$0xf]
  %v23 = vld [vmem:[%s1 + $0xc] sm:$0xff]
  %v24 = vld [vmem:[%s1 + $0x14] sm:$0xf]
  %v25 = vld [vmem:[%s0] sm:$0xf]
  %v26 = vld [vmem:[%s0 + $0x4] sm:$0xf]
  %v27 = vld [vmem:[%s0 + $0x8] sm:$0xf]
  %v28 = vld [vmem:[%s0 + $0xc] sm:$0xf]
  %v29 = vld [vmem:[%s0 + $0x10] sm:$0xf]
  %v30 = vld [vmem:[%s0 + $0x14] sm:$0xf]
  %v31 = vld [vmem:[%s0 + $0x18] sm:$0xf]
  %v32 = vld [vmem:[%s0 + $0x1c] sm:$0xf]
  %v33 = vld [vmem:[%s0 + $0x20] sm:$0xf]
  %v34 = vld [vmem:[%s0 + $0x24] sm:$0xf]
  %v35 = vld [vmem:[%s0 + $0x28] sm:$0xf]
  %v36 = vld [vmem:[%s0 + $0x2c] sm:$0xf]
  %v37 = vld [vmem:[%s0 + $0x30] sm:$0xf]
  %v38 = vld [vmem:[%s0 + $0x34] sm:$0xf]
  %v39 = vld [vmem:[%s0 + $0x38] sm:$0xf]
  %v40 = vld [vmem:[%s0 + $0x3c] sm:$0xf]
  %v41 = vld [vmem:[%s0 + $0x40] sm:$0xf]
  %v42 = vld [vmem:[%s0 + $0x44] sm:$0xf]
  %v43 = vld [vmem:[%s0 + $0x48] sm:$0xf]
  %v44 = vld [vmem:[%s0 + $0x4c] sm:$0xf]
  %v45 = vld [vmem:[%s0 + $0x50] sm:$0xf]
  %v46 = vld [vmem:[%s0 + $0x54] sm:$0xf]
  %v47 = vld [vmem:[%s0 + $0x58] sm:$0xf]
  %v48 = vld [vmem:[%s0 + $0x5c] sm:$0xf]
  %v49 = vld [vmem:[%s0 + $0x60] sm:$0xf]
  %v50 = vld [vmem:[%s0 + $0x64] sm:$0xf]
  %v51 = vld [vmem:[%s0 + $0x68] sm:$0xf]
  %v52 = vld [vmem:[%s0 + $0x6c] sm:$0xf]
  %v53 = vld [vmem:[%s0 + $0x70] sm:$0xf]
  %v54 = vld [vmem:[%s0 + $0x74] sm:$0xf]
  %v55 = vld [vmem:[%s0 + $0x78] sm:$0xf]
  %v56 = vld [vmem:[%s0 + $0x7c] sm:$0xf]
  %v57 = vld [vmem:[%s0 + $0x80] sm:$0xf]
  %v58 = vld [vmem:[%s0 + $0x84] sm:$0xf]
  %v59 = vld [vmem:[%s0 + $0x88] sm:$0xf]
  %v60 = vld [vmem:[%s0 + $0x8c] sm:$0xf]
  %v61 = vld [vmem:[%s2] sm:$0xff]
  %v62 = vld [vmem:[%s2 + $0x8] sm:$0xff]
  %64 = vset.pattern.permute.xlu0 0
  %65 = vperm.xlu0 %64, %v61
  %v66 = vpop.permute.xlu0 %65
  %69 = vset.pattern.permute.xlu0 0
  %70 = vperm.xlu0 %69, %v62
  %v71 = vpop.permute.xlu0 %70
  %v77 = vunpack.c.l.b16 %v21
  %v78 = vunpack.c.h.b16 %v21
  %v79 = vunpack.c.l.b16 %v22
  %v80 = vunpack.c.l.b16 %v23
  %v81 = vunpack.c.h.b16 %v23
  %v82 = vunpack.c.l.b16 %v24
  %v83 = vpack.c.b16 %v80, %v77
  %v84 = vpack.c.b16 %v81, %v78
  %v85 = vpack.c.b16 %v82, %v79
  %v124 = vunpack.c.l.b16 %v25
  %v125 = vunpack.c.l.b16 %v26
  %v126 = vunpack.c.l.b16 %v27
  %v127 = vunpack.c.l.b16 %v28
  %v128 = vunpack.c.l.b16 %v29
  %v129 = vunpack.c.l.b16 %v30
  %v130 = vunpack.c.l.b16 %v31
  %v131 = vunpack.c.l.b16 %v32
  %v132 = vunpack.c.l.b16 %v33
  %v133 = vunpack.c.l.b16 %v34
  %v134 = vunpack.c.l.b16 %v35
  %v135 = vunpack.c.l.b16 %v36
  %v136 = vunpack.c.l.b16 %v37
  %v137 = vunpack.c.l.b16 %v38
  %v138 = vunpack.c.l.b16 %v39
  %v139 = vunpack.c.l.b16 %v40
  %v140 = vunpack.c.l.b16 %v41
  %v141 = vunpack.c.l.b16 %v42
  %v142 = vunpack.c.l.b16 %v43
  %v143 = vunpack.c.l.b16 %v44
  %v144 = vunpack.c.l.b16 %v45
  %v145 = vunpack.c.l.b16 %v46
  %v146 = vunpack.c.l.b16 %v47
  %v147 = vunpack.c.l.b16 %v48
  %v148 = vunpack.c.l.b16 %v49
  %v149 = vunpack.c.l.b16 %v50
  %v150 = vunpack.c.l.b16 %v51
  %v151 = vunpack.c.l.b16 %v52
  %v152 = vunpack.c.l.b16 %v53
  %v153 = vunpack.c.l.b16 %v54
  %v154 = vunpack.c.l.b16 %v55
  %v155 = vunpack.c.l.b16 %v56
  %v156 = vunpack.c.l.b16 %v57
  %v157 = vunpack.c.l.b16 %v58
  %v158 = vunpack.c.l.b16 %v59
  %v159 = vunpack.c.l.b16 %v60
  %v160 = vpack.c.b16 %v125, %v124
  %v161 = vpack.c.b16 %v127, %v126
  %v162 = vpack.c.b16 %v129, %v128
  %v163 = vpack.c.b16 %v131, %v130
  %v164 = vpack.c.b16 %v133, %v132
  %v165 = vpack.c.b16 %v135, %v134
  %v166 = vpack.c.b16 %v137, %v136
  %v167 = vpack.c.b16 %v139, %v138
  %v168 = vpack.c.b16 %v141, %v140
  %v169 = vpack.c.b16 %v143, %v142
  %v170 = vpack.c.b16 %v145, %v144
  %v171 = vpack.c.b16 %v147, %v146
  %v172 = vpack.c.b16 %v149, %v148
  %v173 = vpack.c.b16 %v151, %v150
  %v174 = vpack.c.b16 %v153, %v152
  %v175 = vpack.c.b16 %v155, %v154
  %v176 = vpack.c.b16 %v157, %v156
  %v177 = vpack.c.b16 %v159, %v158
  %vm196 = vcmask 261120
  %v198 = vsel %vm196, %v85, 0
  %200 = vmatpush.bf16.msra.mxu0 %v167
  %201 = vmatpush.bf16.msra.mxu0 %v166
  %202 = vmatpush.bf16.msra.mxu0 %v165
  %203 = vmatpush.bf16.msra.mxu0 %v164
  %204 = vmatpush.bf16.msra.mxu0 %v163
  %205 = vmatpush.bf16.msra.mxu0 %v162
  %206 = vmatpush.bf16.msra.mxu0 %v161
  %207 = vmatpush.bf16.msra.mxu0 %v160
  %208 = vmatmul.bf16.gmra.mxu0 %v83
  %v209 = vpop.f32.mrf.mxu0
  %v210 = vadd.f32 %v66, %v209
  %v211 = vpop.f32.mrf.mxu0
  %v212 = vadd.f32 %v71, %v211
  %213 = vdwg.mxu0
  %214 = vmatpush.bf16.msra.mxu0 %v175
  %215 = vmatpush.bf16.msra.mxu0 %v174
  %216 = vmatpush.bf16.msra.mxu0 %v173
  %217 = vmatpush.bf16.msra.mxu0 %v172
  %218 = vmatpush.bf16.msra.mxu0 %v171
  %219 = vmatpush.bf16.msra.mxu0 %v170
  %220 = vmatpush.bf16.msra.mxu0 %v169
  %221 = vmatpush.bf16.msra.mxu0 %v168
  %222 = vmatmul.bf16.gmra.mxu0 %v84
  %v223 = vpop.f32.mrf.mxu0
  %v224 = vadd.f32 %v210, %v223
  %v225 = vpop.f32.mrf.mxu0
  %v226 = vadd.f32 %v212, %v225
  %227 = vdwg.mxu0
  %228 = vmatpush.bf16.msra.mxu0 0
  %229 = vmatpush.bf16.msra.mxu0 0
  %230 = vmatpush.bf16.msra.mxu0 0
  %231 = vmatpush.bf16.msra.mxu0 0
  %232 = vmatpush.bf16.msra.mxu0 0
  %233 = vmatpush.bf16.msra.mxu0 0
  %234 = vmatpush.bf16.msra.mxu0 %v177
  %235 = vmatpush.bf16.msra.mxu0 %v176
  %236 = vmatmul.bf16.gmra.mxu0 %v198
  %v237 = vpop.f32.mrf.mxu0
  %v238 = vadd.f32 %v224, %v237
  %v239 = vpop.f32.mrf.mxu0
  %v240 = vadd.f32 %v226, %v239
  %241 = vdwg.mxu0
  %242 = vadd.xlane.f32.xlu0 %v238
  %v243 = vpop.xlane.xlu0 %242
  %244 = vadd.xlane.f32.xlu0 %v240
  %v245 = vpop.xlane.xlu0 %244
  %v246 = vmul.f32 %v238, %v238
  %v247 = vmul.f32 %v240, %v240
  %248 = vadd.xlane.f32.xlu0 %v246
  %v249 = vpop.xlane.xlu0 %248
  %250 = vadd.xlane.f32.xlu0 %v247
  %v251 = vpop.xlane.xlu0 %250
  %v252 = vadd.f32 %v243, 0.0
  %v253 = vadd.f32 %v245, 0.0
  %v254 = vadd.f32 %v249, 0.0
  %v255 = vadd.f32 %v251, 0.0
  %v256 = vmul.f32 %v252, 0.0078125
  %v257 = vmul.f32 %v253, 0.0078125
  %v258 = vmul.f32 %v254, 0.0078125
  %v259 = vmul.f32 %v255, 0.0078125
  %v260 = vmul.f32 %v256, %v256
  %v261 = vmul.f32 %v257, %v257
  %v262 = vsub.f32 %v258, %v260
  %v263 = vsub.f32 %v259, %v261
  %v264 = vmax.f32 %v262, 0.0
  %v265 = vmax.f32 %v263, 0.0
  %v266 = vadd.f32 %v264, 1e-05
  %v267 = vadd.f32 %v265, 1e-05
  %v268 = vrsqrt.pop %v266
  %v269 = vmul.f32 %v268, %v266
  %v270 = vmul.f32 %v269, %v268
  %v271 = vmul.f32 0.5, %v270
  %v272 = vsub.f32 1.5, %v271
  %v273 = vmul.f32 %v268, %v272
  %vm274 = vweird.f32 %v266
  %vm275 = vweird.f32 %v268
  %vm276 = vmor %vm274, %vm275
  %v277 = vsel %vm276, %v268, %v273
  %v278 = vrsqrt.pop %v267
  %v279 = vmul.f32 %v278, %v267
  %v280 = vmul.f32 %v279, %v278
  %v281 = vmul.f32 0.5, %v280
  %v282 = vsub.f32 1.5, %v281
  %v283 = vmul.f32 %v278, %v282
  %vm284 = vweird.f32 %v267
  %vm285 = vweird.f32 %v278
  %vm286 = vmor %vm284, %vm285
  %v287 = vsel %vm286, %v278, %v283
  %v288 = vld [vmem:[%s3] sm:$0xff]
  %v289 = vld [vmem:[%s3 + $0x8] sm:$0xff]
  %v290 = vmul.f32 %v288, %v277
  %v291 = vmul.f32 %v289, %v287
  %v292 = vld [vmem:[%s4] sm:$0xff]
  %v293 = vld [vmem:[%s4 + $0x8] sm:$0xff]
  %v294 = vmul.f32 %v256, %v290
  %v295 = vmul.f32 %v257, %v291
  %v296 = vsub.f32 %v292, %v294
  %v297 = vsub.f32 %v293, %v295
  %299 = vset.pattern.permute.xlu0 0
  %300 = vperm.xlu0 %299, %v290
  %v301 = vpop.permute.xlu0 %300
  %304 = vset.pattern.permute.xlu0 0
  %305 = vperm.xlu0 %304, %v291
  %v306 = vpop.permute.xlu0 %305
  %v308 = vmul.f32 %v238, %v301
  %v309 = vmul.f32 %v240, %v306
  %311 = vset.pattern.permute.xlu0 0
  %312 = vperm.xlu0 %311, %v296
  %v313 = vpop.permute.xlu0 %312
  %316 = vset.pattern.permute.xlu0 0
  %317 = vperm.xlu0 %316, %v297
  %v318 = vpop.permute.xlu0 %317
  %v320 = vadd.f32 %v308, %v313
  %v321 = vadd.f32 %v309, %v318
  %v322 = vmax.f32 %v320, 0.0
  %v323 = vmax.f32 %v321, 0.0
  %324 = vst [vmem:[%s5] sm:$0xff] %v322
  %325 = vst [vmem:[%s5 + $0x8] sm:$0xff] %v323
  // Predicated region
  $region22: #{autoencoder_forward.8} parent=0 // pred_check
    _
  $region23: #{autoencoder_forward.8} parent=0 // pred_check_branch
    %327 = sbr.rel (0) target = $region25
  $region24: #{autoencoder_forward.8} parent=0 // pred_region
    _
  $region25: #{autoencoder_forward.8} parent=0 // pred_fallthru
    _
  // Predicated region
  $region26: #{autoencoder_forward.8} parent=0 // pred_check
    _
  $region27: #{autoencoder_forward.8} parent=0 // pred_check_branch
    %329 = sbr.rel (0) target = $region29
  $region28: #{autoencoder_forward.8} parent=0 // pred_region
    _
  $region29: #{autoencoder_forward.8} parent=0 // pred_fallthru
    _

// kernel: autoencoder_forward.9
$region0: #{autoencoder_forward.9}
  #allocation0 [shape = 'u32[]', space=smem, size = 0x4, offset = 0x4, fixed_abs, tag = 'smem constant byte address 0x4 - core index']
  #allocation1 [shape = 'u32[72,128]{1,0:T(1,128)}', space=vmem, size = 0x9000, scoped, tag = 'internal scratch']
  %s0 = inlined_call_operand.vmem [shape: bf16[144,32], index: 0, kind: input, shape index: {}]
  %s1 = inlined_call_operand.vmem [shape: bf16[8,144], index: 1, kind: input, shape index: {}]
  %s2 = inlined_call_operand.vmem [shape: f32[8,1], index: 2, kind: input, shape index: {}]
  %s3 = inlined_call_operand.vmem [shape: f32[8,1], index: 3, kind: input, shape index: {}]
  %s4 = inlined_call_operand.vmem [shape: f32[8,1], index: 4, kind: input, shape index: {}]
  %s5 = inlined_call_operand.vmem [shape: f32[8,32], index: 5, kind: output, shape index: {}]
  %s6 = sld [smem:[#allocation0]]
  $region30: #{autoencoder_forward.9} parent=0
    _
  %s8 = ssub.s32 1, %s6
  %s9 = scalar_select 0, %s8, %s6
  // Predicated region
  $region2: #{autoencoder_forward.9} parent=0 // pred_check
    _
  $region3: #{autoencoder_forward.9} parent=0 // pred_check_branch
    %11 = sbr.rel (0) target = $region5
  $region4: #{autoencoder_forward.9} parent=0 // pred_region
    _
  $region5: #{autoencoder_forward.9} parent=0 // pred_fallthru
    _
  // Predicated region
  $region6: #{autoencoder_forward.9} parent=0 // pred_check
    _
  $region7: #{autoencoder_forward.9} parent=0 // pred_check_branch
    %13 = sbr.rel (0) target = $region9
  $region8: #{autoencoder_forward.9} parent=0 // pred_region
    _
  $region9: #{autoencoder_forward.9} parent=0 // pred_fallthru
    _
  // Predicated region
  $region10: #{autoencoder_forward.9} parent=0 // pred_check
    _
  $region11: #{autoencoder_forward.9} parent=0 // pred_check_branch
    %15 = sbr.rel (0) target = $region13
  $region12: #{autoencoder_forward.9} parent=0 // pred_region
    _
  $region13: #{autoencoder_forward.9} parent=0 // pred_fallthru
    _
  // Predicated region
  $region14: #{autoencoder_forward.9} parent=0 // pred_check
    _
  $region15: #{autoencoder_forward.9} parent=0 // pred_check_branch
    %17 = sbr.rel (0) target = $region17
  $region16: #{autoencoder_forward.9} parent=0 // pred_region
    _
  $region17: #{autoencoder_forward.9} parent=0 // pred_fallthru
    _
  // Predicated region
  $region18: #{autoencoder_forward.9} parent=0 // pred_check
    _
  $region19: #{autoencoder_forward.9} parent=0 // pred_check_branch
    %19 = sbr.rel (0) target = $region21
  $region20: #{autoencoder_forward.9} parent=0 // pred_region
    _
  $region21: #{autoencoder_forward.9} parent=0 // pred_fallthru
    _
  %v21 = vld [vmem:[%s1] sm:$0xff]
  %v22 = vld [vmem:[%s0] sm:$0xf]
  %v23 = vld [vmem:[%s0 + $0x4] sm:$0xf]
  %v24 = vld [vmem:[%s0 + $0x8] sm:$0xf]
  %v25 = vld [vmem:[%s0 + $0xc] sm:$0xf]
  %v26 = vld [vmem:[%s0 + $0x10] sm:$0xf]
  %v27 = vld [vmem:[%s0 + $0x14] sm:$0xf]
  %v28 = vld [vmem:[%s0 + $0x18] sm:$0xf]
  %v29 = vld [vmem:[%s0 + $0x1c] sm:$0xf]
  %v30 = vld [vmem:[%s0 + $0x20] sm:$0xf]
  %v31 = vld [vmem:[%s0 + $0x24] sm:$0xf]
  %v32 = vld [vmem:[%s0 + $0x28] sm:$0xf]
  %v33 = vld [vmem:[%s0 + $0x2c] sm:$0xf]
  %v34 = vld [vmem:[%s0 + $0x30] sm:$0xf]
  %v35 = vld [vmem:[%s0 + $0x34] sm:$0xf]
  %v36 = vld [vmem:[%s0 + $0x38] sm:$0xf]
  %v37 = vld [vmem:[%s0 + $0x3c] sm:$0xf]
  %v38 = vld [vmem:[%s0 + $0x40] sm:$0xf]
  %v39 = vld [vmem:[%s0 + $0x44] sm:$0xf]
  %v40 = vld [vmem:[%s2] sm:$0xff]
  %42 = vset.pattern.permute.xlu0 0
  %43 = vperm.xlu0 %42, %v40
  %v44 = vpop.permute.xlu0 %43
  %v47 = vunpack.c.l.b16 %v21
  %v48 = vunpack.c.h.b16 %v21
  %v49 = vpack.c.b16 %v47, %v47
  %v50 = vpack.c.b16 %v48, %v48
  %v70 = vunpack.c.l.b16 %v22
  %v71 = vunpack.c.l.b16 %v23
  %v72 = vunpack.c.l.b16 %v24
  %v73 = vunpack.c.l.b16 %v25
  %v74 = vunpack.c.l.b16 %v26
  %v75 = vunpack.c.l.b16 %v27
  %v76 = vunpack.c.l.b16 %v28
  %v77 = vunpack.c.l.b16 %v29
  %v78 = vunpack.c.l.b16 %v30
  %v79 = vunpack.c.l.b16 %v31
  %v80 = vunpack.c.l.b16 %v32
  %v81 = vunpack.c.l.b16 %v33
  %v82 = vunpack.c.l.b16 %v34
  %v83 = vunpack.c.l.b16 %v35
  %v84 = vunpack.c.l.b16 %v36
  %v85 = vunpack.c.l.b16 %v37
  %v86 = vunpack.c.l.b16 %v38
  %v87 = vunpack.c.l.b16 %v39
  %v88 = vpack.c.b16 %v71, %v70
  %v89 = vpack.c.b16 %v73, %v72
  %v90 = vpack.c.b16 %v75, %v74
  %v91 = vpack.c.b16 %v77, %v76
  %v92 = vpack.c.b16 %v79, %v78
  %v93 = vpack.c.b16 %v81, %v80
  %v94 = vpack.c.b16 %v83, %v82
  %v95 = vpack.c.b16 %v85, %v84
  %v96 = vpack.c.b16 %v87, %v86
  %vm106 = vcmask 130048
  %v108 = vsel %vm106, %v50, 0
  %110 = vmatpush.bf16.msra.mxu0 %v95
  %111 = vmatpush.bf16.msra.mxu0 %v94
  %112 = vmatpush.bf16.msra.mxu0 %v93
  %113 = vmatpush.bf16.msra.mxu0 %v92
  %114 = vmatpush.bf16.msra.mxu0 %v91
  %115 = vmatpush.bf16.msra.mxu0 %v90
  %116 = vmatpush.bf16.msra.mxu0 %v89
  %117 = vmatpush.bf16.msra.mxu0 %v88
  %118 = vmatmul.bf16.gmra.mxu0 %v49
  %v119 = vpop.f32.mrf.mxu0
  %v120 = vadd.f32 %v44, %v119
  %v121 = vpop.f32.mrf.mxu0
  %122 = vdwg.mxu0
  %123 = vmatpush.bf16.msra.mxu0 0
  %124 = vmatpush.bf16.msra.mxu0 0
  %125 = vmatpush.bf16.msra.mxu0 0
  %126 = vmatpush.bf16.msra.mxu0 0
  %127 = vmatpush.bf16.msra.mxu0 0
  %128 = vmatpush.bf16.msra.mxu0 0
  %129 = vmatpush.bf16.msra.mxu0 0
  %130 = vmatpush.bf16.msra.mxu0 %v96
  %131 = vmatmul.bf16.gmra.mxu0 %v108
  %v132 = vpop.f32.mrf.mxu0
  %v133 = vadd.f32 %v120, %v132
  %v134 = vpop.f32.mrf.mxu0
  %135 = vdwg.mxu0
  %vm136 = vcmask 261120
  %v137 = vsel %vm136, %v133, 0.0
  %138 = vadd.xlane.f32.xlu0 %v137
  %v139 = vpop.xlane.xlu0 %138
  %v140 = vmul.f32 %v133, %v133
  %v141 = vsel %vm136, %v140, 0.0
  %142 = vadd.xlane.f32.xlu0 %v141
  %v143 = vpop.xlane.xlu0 %142
  %v144 = vadd.f32 %v139, 0.0
  %v145 = vadd.f32 %v143, 0.0
  %v146 = vmul.f32 %v144, 0.03125
  %v147 = vmul.f32 %v145, 0.03125
  %v148 = vmul.f32 %v146, %v146
  %v149 = vsub.f32 %v147, %v148
  %v150 = vmax.f32 %v149, 0.0
  %v151 = vadd.f32 %v150, 1e-05
  %v152 = vrsqrt.pop %v151
  %v153 = vmul.f32 %v152, %v151
  %v154 = vmul.f32 %v153, %v152
  %v155 = vmul.f32 0.5, %v154
  %v156 = vsub.f32 1.5, %v155
  %v157 = vmul.f32 %v152, %v156
  %vm158 = vweird.f32 %v151
  %vm159 = vweird.f32 %v152
  %vm160 = vmor %vm158, %vm159
  %v161 = vsel %vm160, %v152, %v157
  %v162 = vld [vmem:[%s3] sm:$0xff]
  %v163 = vmul.f32 %v162, %v161
  %v164 = vld [vmem:[%s4] sm:$0xff]
  %v165 = vmul.f32 %v146, %v163
  %v166 = vsub.f32 %v164, %v165
  %168 = vset.pattern.permute.xlu0 0
  %169 = vperm.xlu0 %168, %v163
  %v170 = vpop.permute.xlu0 %169
  %v172 = vmul.f32 %v133, %v170
  %174 = vset.pattern.permute.xlu0 0
  %175 = vperm.xlu0 %174, %v166
  %v176 = vpop.permute.xlu0 %175
  %v178 = vadd.f32 %v172, %v176
  %v179 = vmax.f32 %v178, 0.0
  %180 = vst.msk [vmem:[%s5] sm:$0xff] %vm136, %v179
  // Predicated region
  $region22: #{autoencoder_forward.9} parent=0 // pred_check
    _
  $region23: #{autoencoder_forward.9} parent=0 // pred_check_branch
    %182 = sbr.rel (0) target = $region25
  $region24: #{autoencoder_forward.9} parent=0 // pred_region
    _
  $region25: #{autoencoder_forward.9} parent=0 // pred_fallthru
    _
  // Predicated region
  $region26: #{autoencoder_forward.9} parent=0 // pred_check
    _
  $region27: #{autoencoder_forward.9} parent=0 // pred_check_branch
    %184 = sbr.rel (0) target = $region29
  $region28: #{autoencoder_forward.9} parent=0 // pred_region
    _
  $region29: #{autoencoder_forward.9} parent=0 // pred_fallthru
    _

// kernel: autoencoder_forward.10
$region0: #{autoencoder_forward.10}
  #allocation0 [shape = 'u32[]', space=smem, size = 0x4, offset = 0x4, fixed_abs, tag = 'smem constant byte address 0x4 - core index']
  #allocation1 [shape = 'u32[72,128]{1,0:T(1,128)}', space=vmem, size = 0x9000, scoped, tag = 'internal scratch']
  %s0 = inlined_call_operand.vmem [shape: f32[128,2], index: 0, kind: input, shape index: {}]
  %s1 = inlined_call_operand.vmem [shape: f32[64,128], index: 1, kind: input, shape index: {}]
  %s2 = inlined_call_operand.vmem [shape: f32[64,1], index: 2, kind: input, shape index: {}]
  %s3 = inlined_call_operand.vmem [shape: f32[128,64], index: 3, kind: input, shape index: {}]
  %s4 = inlined_call_operand.vmem [shape: f32[128,1], index: 4, kind: input, shape index: {}]
  %s5 = inlined_call_operand.vmem [shape: f32[64,2], index: 5, kind: output, shape index: {0}]
  %s6 = inlined_call_operand.vmem [shape: f32[128,2], index: 6, kind: output, shape index: {1}]
  %7 = xla_tuple %s5, %s6
  %s8 = sld [smem:[#allocation0]]
  $region38: #{autoencoder_forward.10} parent=0
    _
  %s10 = ssub.s32 1, %s8
  %s11 = scalar_select 0, %s10, %s8
  // Predicated region
  $region2: #{autoencoder_forward.10} parent=0 // pred_check
    _
  $region3: #{autoencoder_forward.10} parent=0 // pred_check_branch
    %13 = sbr.rel (0) target = $region5
  $region4: #{autoencoder_forward.10} parent=0 // pred_region
    _
  $region5: #{autoencoder_forward.10} parent=0 // pred_fallthru
    _
  // Predicated region
  $region6: #{autoencoder_forward.10} parent=0 // pred_check
    _
  $region7: #{autoencoder_forward.10} parent=0 // pred_check_branch
    %15 = sbr.rel (0) target = $region9
  $region8: #{autoencoder_forward.10} parent=0 // pred_region
    _
  $region9: #{autoencoder_forward.10} parent=0 // pred_fallthru
    _
  // Predicated region
  $region10: #{autoencoder_forward.10} parent=0 // pred_check
    _
  $region11: #{autoencoder_forward.10} parent=0 // pred_check_branch
    %17 = sbr.rel (0) target = $region13
  $region12: #{autoencoder_forward.10} parent=0 // pred_region
    _
  $region13: #{autoencoder_forward.10} parent=0 // pred_fallthru
    _
  // Predicated region
  $region14: #{autoencoder_forward.10} parent=0 // pred_check
    _
  $region15: #{autoencoder_forward.10} parent=0 // pred_check_branch
    %19 = sbr.rel (0) target = $region17
  $region16: #{autoencoder_forward.10} parent=0 // pred_region
    _
  $region17: #{autoencoder_forward.10} parent=0 // pred_fallthru
    _
  // Predicated region
  $region18: #{autoencoder_forward.10} parent=0 // pred_check
    _
  $region19: #{autoencoder_forward.10} parent=0 // pred_check_branch
    %21 = sbr.rel (0) target = $region21
  $region20: #{autoencoder_forward.10} parent=0 // pred_region
    _
  $region21: #{autoencoder_forward.10} parent=0 // pred_fallthru
    _
  %v22 = vld [vmem:[%s1] sm:$0xff]
  %v23 = vld [vmem:[%s1 + $0x8] sm:$0xff]
  %v24 = vld [vmem:[%s1 + $0x10] sm:$0xff]
  %v25 = vld [vmem:[%s1 + $0x18] sm:$0xff]
  %v26 = vld [vmem:[%s1 + $0x20] sm:$0xff]
  %v27 = vld [vmem:[%s1 + $0x28] sm:$0xff]
  %v28 = vld [vmem:[%s1 + $0x30] sm:$0xff]
  %v29 = vld [vmem:[%s1 + $0x38] sm:$0xff]
  %v30 = vld [vmem:[%s0] sm:$0xff]
  %v31 = vld [vmem:[%s0 + $0x8] sm:$0xff]
  %v32 = vld [vmem:[%s0 + $0x10] sm:$0xff]
  %v33 = vld [vmem:[%s0 + $0x18] sm:$0xff]
  %v34 = vld [vmem:[%s0 + $0x20] sm:$0xff]
  %v35 = vld [vmem:[%s0 + $0x28] sm:$0xff]
  %v36 = vld [vmem:[%s0 + $0x30] sm:$0xff]
  %v37 = vld [vmem:[%s0 + $0x38] sm:$0xff]
  %v38 = vld [vmem:[%s0 + $0x40] sm:$0xff]
  %v39 = vld [vmem:[%s0 + $0x48] sm:$0xff]
  %v40 = vld [vmem:[%s0 + $0x50] sm:$0xff]
  %v41 = vld [vmem:[%s0 + $0x58] sm:$0xff]
  %v42 = vld [vmem:[%s0 + $0x60] sm:$0xff]
  %v43 = vld [vmem:[%s0 + $0x68] sm:$0xff]
  %v44 = vld [vmem:[%s0 + $0x70] sm:$0xff]
  %v45 = vld [vmem:[%s0 + $0x78] sm:$0xff]
  %v46 = vld [vmem:[%s2] sm:$0xff]
  %v47 = vld [vmem:[%s2 + $0x8] sm:$0xff]
  %v48 = vld [vmem:[%s2 + $0x10] sm:$0xff]
  %v49 = vld [vmem:[%s2 + $0x18] sm:$0xff]
  %v50 = vld [vmem:[%s2 + $0x20] sm:$0xff]
  %v51 = vld [vmem:[%s2 + $0x28] sm:$0xff]
  %v52 = vld [vmem:[%s2 + $0x30] sm:$0xff]
  %v53 = vld [vmem:[%s2 + $0x38] sm:$0xff]
  %55 = vset.pattern.permute.xlu0 0
  %56 = vperm.xlu0 %55, %v46
  %v57 = vpop.permute.xlu0 %56
  %60 = vset.pattern.permute.xlu0 0
  %61 = vperm.xlu0 %60, %v47
  %v62 = vpop.permute.xlu0 %61
  %65 = vset.pattern.permute.xlu0 0
  %66 = vperm.xlu0 %65, %v48
  %v67 = vpop.permute.xlu0 %66
  %70 = vset.pattern.permute.xlu0 0
  %71 = vperm.xlu0 %70, %v49
  %v72 = vpop.permute.xlu0 %71
  %75 = vset.pattern.permute.xlu0 0
  %76 = vperm.xlu0 %75, %v50
  %v77 = vpop.permute.xlu0 %76
  %80 = vset.pattern.permute.xlu0 0
  %81 = vperm.xlu0 %80, %v51
  %v82 = vpop.permute.xlu0 %81
  %85 = vset.pattern.permute.xlu0 0
  %86 = vperm.xlu0 %85, %v52
  %v87 = vpop.permute.xlu0 %86
  %90 = vset.pattern.permute.xlu0 0
  %91 = vperm.xlu0 %90, %v53
  %v92 = vpop.permute.xlu0 %91
  %94 = vmatpush.msra.mxu0 %v45
  %95 = vmatpush.msra.mxu0 %v44
  %96 = vmatpush.msra.mxu0 %v43
  %97 = vmatpush.msra.mxu0 %v42
  %98 = vmatpush.msra.mxu0 %v41
  %99 = vmatpush.msra.mxu0 %v40
  %100 = vmatpush.msra.mxu0 %v39
  %101 = vmatpush.msra.mxu0 %v38
  %102 = vmatpush.msra.mxu0 %v37
  %103 = vmatpush.msra.mxu0 %v36
  %104 = vmatpush.msra.mxu0 %v35
  %105 = vmatpush.msra.mxu0 %v34
  %106 = vmatpush.msra.mxu0 %v33
  %107 = vmatpush.msra.mxu0 %v32
  %108 = vmatpush.msra.mxu0 %v31
  %109 = vmatpush.msra.mxu0 %v30
  %110 = vmatmul.f32.gmra.mxu0 %v22
  %v111 = vpop.f32.mrf.mxu0
  %v112 = vadd.f32 %v57, %v111
  %113 = vmatmul.f32.gmra.mxu0 %v23
  %v114 = vpop.f32.mrf.mxu0
  %v115 = vadd.f32 %v62, %v114
  %116 = vmatmul.f32.gmra.mxu0 %v24
  %v117 = vpop.f32.mrf.mxu0
  %v118 = vadd.f32 %v67, %v117
  %119 = vmatmul.f32.gmra.mxu0 %v25
  %v120 = vpop.f32.mrf.mxu0
  %v121 = vadd.f32 %v72, %v120
  %122 = vmatmul.f32.gmra.mxu0 %v26
  %v123 = vpop.f32.mrf.mxu0
  %v124 = vadd.f32 %v77, %v123
  %125 = vmatmul.f32.gmra.mxu0 %v27
  %v126 = vpop.f32.mrf.mxu0
  %v127 = vadd.f32 %v82, %v126
  %128 = vmatmul.f32.gmra.mxu0 %v28
  %v129 = vpop.f32.mrf.mxu0
  %v130 = vadd.f32 %v87, %v129
  %131 = vmatmul.f32.gmra.mxu0 %v29
  %v132 = vpop.f32.mrf.mxu0
  %v133 = vadd.f32 %v92, %v132
  %134 = vdwg.mxu0
  %vm135 = vcmask 15360
  %136 = vst.msk [vmem:[%s5] sm:$0xff] %vm135, %v112
  %137 = vst.msk [vmem:[%s5 + $0x8] sm:$0xff] %vm135, %v115
  %138 = vst.msk [vmem:[%s5 + $0x10] sm:$0xff] %vm135, %v118
  %139 = vst.msk [vmem:[%s5 + $0x18] sm:$0xff] %vm135, %v121
  %140 = vst.msk [vmem:[%s5 + $0x20] sm:$0xff] %vm135, %v124
  %141 = vst.msk [vmem:[%s5 + $0x28] sm:$0xff] %vm135, %v127
  %142 = vst.msk [vmem:[%s5 + $0x30] sm:$0xff] %vm135, %v130
  %143 = vst.msk [vmem:[%s5 + $0x38] sm:$0xff] %vm135, %v133
  %v144 = vld [vmem:[%s3] sm:$0xff]
  %v145 = vld [vmem:[%s3 + $0x8] sm:$0xff]
  %v146 = vld [vmem:[%s3 + $0x10] sm:$0xff]
  %v147 = vld [vmem:[%s3 + $0x18] sm:$0xff]
  %v148 = vld [vmem:[%s3 + $0x20] sm:$0xff]
  %v149 = vld [vmem:[%s3 + $0x28] sm:$0xff]
  %v150 = vld [vmem:[%s3 + $0x30] sm:$0xff]
  %v151 = vld [vmem:[%s3 + $0x38] sm:$0xff]
  %v152 = vld [vmem:[%s3 + $0x40] sm:$0xff]
  %v153 = vld [vmem:[%s3 + $0x48] sm:$0xff]
  %v154 = vld [vmem:[%s3 + $0x50] sm:$0xff]
  %v155 = vld [vmem:[%s3 + $0x58] sm:$0xff]
  %v156 = vld [vmem:[%s3 + $0x60] sm:$0xff]
  %v157 = vld [vmem:[%s3 + $0x68] sm:$0xff]
  %v158 = vld [vmem:[%s3 + $0x70] sm:$0xff]
  %v159 = vld [vmem:[%s3 + $0x78] sm:$0xff]
  %v160 = vld [vmem:[%s4] sm:$0xff]
  %v161 = vld [vmem:[%s4 + $0x8] sm:$0xff]
  %v162 = vld [vmem:[%s4 + $0x10] sm:$0xff]
  %v163 = vld [vmem:[%s4 + $0x18] sm:$0xff]
  %v164 = vld [vmem:[%s4 + $0x20] sm:$0xff]
  %v165 = vld [vmem:[%s4 + $0x28] sm:$0xff]
  %v166 = vld [vmem:[%s4 + $0x30] sm:$0xff]
  %v167 = vld [vmem:[%s4 + $0x38] sm:$0xff]
  %v168 = vld [vmem:[%s4 + $0x40] sm:$0xff]
  %v169 = vld [vmem:[%s4 + $0x48] sm:$0xff]
  %v170 = vld [vmem:[%s4 + $0x50] sm:$0xff]
  %v171 = vld [vmem:[%s4 + $0x58] sm:$0xff]
  %v172 = vld [vmem:[%s4 + $0x60] sm:$0xff]
  %v173 = vld [vmem:[%s4 + $0x68] sm:$0xff]
  %v174 = vld [vmem:[%s4 + $0x70] sm:$0xff]
  %v175 = vld [vmem:[%s4 + $0x78] sm:$0xff]
  %177 = vset.pattern.permute.xlu0 0
  %178 = vperm.xlu0 %177, %v160
  %v179 = vpop.permute.xlu0 %178
  %182 = vset.pattern.permute.xlu0 0
  %183 = vperm.xlu0 %182, %v161
  %v184 = vpop.permute.xlu0 %183
  %187 = vset.pattern.permute.xlu0 0
  %188 = vperm.xlu0 %187, %v162
  %v189 = vpop.permute.xlu0 %188
  %192 = vset.pattern.permute.xlu0 0
  %193 = vperm.xlu0 %192, %v163
  %v194 = vpop.permute.xlu0 %193
  %197 = vset.pattern.permute.xlu0 0
  %198 = vperm.xlu0 %197, %v164
  %v199 = vpop.permute.xlu0 %198
  %202 = vset.pattern.permute.xlu0 0
  %203 = vperm.xlu0 %202, %v165
  %v204 = vpop.permute.xlu0 %203
  %207 = vset.pattern.permute.xlu0 0
  %208 = vperm.xlu0 %207, %v166
  %v209 = vpop.permute.xlu0 %208
  %212 = vset.pattern.permute.xlu0 0
  %213 = vperm.xlu0 %212, %v167
  %v214 = vpop.permute.xlu0 %213
  %217 = vset.pattern.permute.xlu0 0
  %218 = vperm.xlu0 %217, %v168
  %v219 = vpop.permute.xlu0 %218
  %222 = vset.pattern.permute.xlu0 0
  %223 = vperm.xlu0 %222, %v169
  %v224 = vpop.permute.xlu0 %223
  %227 = vset.pattern.permute.xlu0 0
  %228 = vperm.xlu0 %227, %v170
  %v229 = vpop.permute.xlu0 %228
  %232 = vset.pattern.permute.xlu0 0
  %233 = vperm.xlu0 %232, %v171
  %v234 = vpop.permute.xlu0 %233
  %237 = vset.pattern.permute.xlu0 0
  %238 = vperm.xlu0 %237, %v172
  %v239 = vpop.permute.xlu0 %238
  %242 = vset.pattern.permute.xlu0 0
  %243 = vperm.xlu0 %242, %v173
  %v244 = vpop.permute.xlu0 %243
  %247 = vset.pattern.permute.xlu0 0
  %248 = vperm.xlu0 %247, %v174
  %v249 = vpop.permute.xlu0 %248
  %252 = vset.pattern.permute.xlu0 0
  %253 = vperm.xlu0 %252, %v175
  %v254 = vpop.permute.xlu0 %253
  %vm256 = vcmask 523264
  %v258 = vsel %vm256, %v144, 0
  %v261 = vsel %vm256, %v145, 0
  %v264 = vsel %vm256, %v146, 0
  %v267 = vsel %vm256, %v147, 0
  %v270 = vsel %vm256, %v148, 0
  %v273 = vsel %vm256, %v149, 0
  %v276 = vsel %vm256, %v150, 0
  %v279 = vsel %vm256, %v151, 0
  %v282 = vsel %vm256, %v152, 0
  %v285 = vsel %vm256, %v153, 0
  %v288 = vsel %vm256, %v154, 0
  %v291 = vsel %vm256, %v155, 0
  %v294 = vsel %vm256, %v156, 0
  %v297 = vsel %vm256, %v157, 0
  %v300 = vsel %vm256, %v158, 0
  %v303 = vsel %vm256, %v159, 0
  %305 = vmatpush.msra.mxu0 0.0
  %306 = vmatpush.msra.mxu0 0.0
  %307 = vmatpush.msra.mxu0 0.0
  %308 = vmatpush.msra.mxu0 0.0
  %309 = vmatpush.msra.mxu0 0.0
  %310 = vmatpush.msra.mxu0 0.0
  %311 = vmatpush.msra.mxu0 0.0
  %312 = vmatpush.msra.mxu0 0.0
  %313 = vmatpush.msra.mxu0 %v133
  %314 = vmatpush.msra.mxu0 %v130
  %315 = vmatpush.msra.mxu0 %v127
  %316 = vmatpush.msra.mxu0 %v124
  %317 = vmatpush.msra.mxu0 %v121
  %318 = vmatpush.msra.mxu0 %v118
  %319 = vmatpush.msra.mxu0 %v115
  %320 = vmatpush.msra.mxu0 %v112
  %321 = vmatmul.f32.gmra.mxu0 %v258
  %v322 = vpop.f32.mrf.mxu0
  %v323 = vadd.f32 %v179, %v322
  %324 = vmatmul.f32.gmra.mxu0 %v261
  %v325 = vpop.f32.mrf.mxu0
  %v326 = vadd.f32 %v184, %v325
  %327 = vmatmul.f32.gmra.mxu0 %v264
  %v328 = vpop.f32.mrf.mxu0
  %v329 = vadd.f32 %v189, %v328
  %330 = vmatmul.f32.gmra.mxu0 %v267
  %v331 = vpop.f32.mrf.mxu0
  %v332 = vadd.f32 %v194, %v331
  %333 = vmatmul.f32.gmra.mxu0 %v270
  %v334 = vpop.f32.mrf.mxu0
  %v335 = vadd.f32 %v199, %v334
  %336 = vmatmul.f32.gmra.mxu0 %v273
  %v337 = vpop.f32.mrf.mxu0
  %v338 = vadd.f32 %v204, %v337
  %339 = vmatmul.f32.gmra.mxu0 %v276
  %v340 = vpop.f32.mrf.mxu0
  %v341 = vadd.f32 %v209, %v340
  %342 = vmatmul.f32.gmra.mxu0 %v279
  %v343 = vpop.f32.mrf.mxu0
  %v344 = vadd.f32 %v214, %v343
  %345 = vmatmul.f32.gmra.mxu0 %v282
  %v346 = vpop.f32.mrf.mxu0
  %v347 = vadd.f32 %v219, %v346
  %348 = vmatmul.f32.gmra.mxu0 %v285
  %v349 = vpop.f32.mrf.mxu0
  %v350 = vadd.f32 %v224, %v349
  %351 = vmatmul.f32.gmra.mxu0 %v288
  %v352 = vpop.f32.mrf.mxu0
  %v353 = vadd.f32 %v229, %v352
  %354 = vmatmul.f32.gmra.mxu0 %v291
  %v355 = vpop.f32.mrf.mxu0
  %v356 = vadd.f32 %v234, %v355
  %357 = vmatmul.f32.gmra.mxu0 %v294
  %v358 = vpop.f32.mrf.mxu0
  %v359 = vadd.f32 %v239, %v358
  %360 = vmatmul.f32.gmra.mxu0 %v297
  %v361 = vpop.f32.mrf.mxu0
  %v362 = vadd.f32 %v244, %v361
  %363 = vmatmul.f32.gmra.mxu0 %v300
  %v364 = vpop.f32.mrf.mxu0
  %v365 = vadd.f32 %v249, %v364
  %366 = vmatmul.f32.gmra.mxu0 %v303
  %v367 = vpop.f32.mrf.mxu0
  %v368 = vadd.f32 %v254, %v367
  %369 = vdwg.mxu0
  %370 = vst.msk [vmem:[%s6] sm:$0xff] %vm135, %v323
  %371 = vst.msk [vmem:[%s6 + $0x8] sm:$0xff] %vm135, %v326
  %372 = vst.msk [vmem:[%s6 + $0x10] sm:$0xff] %vm135, %v329
  %373 = vst.msk [vmem:[%s6 + $0x18] sm:$0xff] %vm135, %v332
  %374 = vst.msk [vmem:[%s6 + $0x20] sm:$0xff] %vm135, %v335
  %375 = vst.msk [vmem:[%s6 + $0x28] sm:$0xff] %vm135, %v338
  %376 = vst.msk [vmem:[%s6 + $0x30] sm:$0xff] %vm135, %v341
  %377 = vst.msk [vmem:[%s6 + $0x38] sm:$0xff] %vm135, %v344
  %378 = vst.msk [vmem:[%s6 + $0x40] sm:$0xff] %vm135, %v347
  %379 = vst.msk [vmem:[%s6 + $0x48] sm:$0xff] %vm135, %v350
  %380 = vst.msk [vmem:[%s6 + $0x50] sm:$0xff] %vm135, %v353
  %381 = vst.msk [vmem:[%s6 + $0x58] sm:$0xff] %vm135, %v356
  %382 = vst.msk [vmem:[%s6 + $0x60] sm:$0xff] %vm135, %v359
  %383 = vst.msk [vmem:[%s6 + $0x68] sm:$0xff] %vm135, %v362
  %384 = vst.msk [vmem:[%s6 + $0x70] sm:$0xff] %vm135, %v365
  %385 = vst.msk [vmem:[%s6 + $0x78] sm:$0xff] %vm135, %v368
  // Predicated region
  $region22: #{autoencoder_forward.10} parent=0 // pred_check
    _
  $region23: #{autoencoder_forward.10} parent=0 // pred_check_branch
    %387 = sbr.rel (0) target = $region25
  $region24: #{autoencoder_forward.10} parent=0 // pred_region
    _
  $region25: #{autoencoder_forward.10} parent=0 // pred_fallthru
    _
  // Predicated region
  $region26: #{autoencoder_forward.10} parent=0 // pred_check
    _
  $region27: #{autoencoder_forward.10} parent=0 // pred_check_branch
    %389 = sbr.rel (0) target = $region29
  $region28: #{autoencoder_forward.10} parent=0 // pred_region
    _
  $region29: #{autoencoder_forward.10} parent=0 // pred_fallthru
    _
  // Predicated region
  $region30: #{autoencoder_forward.10} parent=0 // pred_check
    _
  $region31: #{autoencoder_forward.10} parent=0 // pred_check_branch
    %391 = sbr.rel (0) target = $region33
  $region32: #{autoencoder_forward.10} parent=0 // pred_region
    _
  $region33: #{autoencoder_forward.10} parent=0 // pred_fallthru
    _
  // Predicated region
  $region34: #{autoencoder_forward.10} parent=0 // pred_check
    _
  $region35: #{autoencoder_forward.10} parent=0 // pred_check_branch
    %393 = sbr.rel (0) target = $region37
  $region36: #{autoencoder_forward.10} parent=0 // pred_region
    _
  $region37: #{autoencoder_forward.10} parent=0 // pred_fallthru
    _

// kernel: autoencoder_forward.11
$region0: #{autoencoder_forward.11}
  #allocation0 [shape = 'u32[]', space=smem, size = 0x4, offset = 0x4, fixed_abs, tag = 'smem constant byte address 0x4 - core index']
  #allocation1 [shape = 'u32[72,128]{1,0:T(1,128)}', space=vmem, size = 0x9000, scoped, tag = 'internal scratch']
  %s0 = inlined_call_operand.vmem [shape: bf16[32,32], index: 0, kind: input, shape index: {}]
  %s1 = inlined_call_operand.vmem [shape: bf16[64,32], index: 1, kind: input, shape index: {}]
  %s2 = inlined_call_operand.vmem [shape: f32[64,1], index: 2, kind: input, shape index: {}]
  %s3 = inlined_call_operand.vmem [shape: f32[16,1], index: 3, kind: input, shape index: {}]
  %s4 = inlined_call_operand.vmem [shape: f32[16,1], index: 4, kind: input, shape index: {}]
  %s5 = inlined_call_operand.vmem [shape: f32[64,32], index: 5, kind: output, shape index: {}]
  %s6 = sld [smem:[#allocation0]]
  $region30: #{autoencoder_forward.11} parent=0
    _
  %s8 = ssub.s32 1, %s6
  %s9 = scalar_select 0, %s8, %s6
  // Predicated region
  $region2: #{autoencoder_forward.11} parent=0 // pred_check
    _
  $region3: #{autoencoder_forward.11} parent=0 // pred_check_branch
    %11 = sbr.rel (0) target = $region5
  $region4: #{autoencoder_forward.11} parent=0 // pred_region
    _
  $region5: #{autoencoder_forward.11} parent=0 // pred_fallthru
    _
  // Predicated region
  $region6: #{autoencoder_forward.11} parent=0 // pred_check
    _
  $region7: #{autoencoder_forward.11} parent=0 // pred_check_branch
    %13 = sbr.rel (0) target = $region9
  $region8: #{autoencoder_forward.11} parent=0 // pred_region
    _
  $region9: #{autoencoder_forward.11} parent=0 // pred_fallthru
    _
  // Predicated region
  $region10: #{autoencoder_forward.11} parent=0 // pred_check
    _
  $region11: #{autoencoder_forward.11} parent=0 // pred_check_branch
    %15 = sbr.rel (0) target = $region13
  $region12: #{autoencoder_forward.11} parent=0 // pred_region
    _
  $region13: #{autoencoder_forward.11} parent=0 // pred_fallthru
    _
  // Predicated region
  $region14: #{autoencoder_forward.11} parent=0 // pred_check
    _
  $region15: #{autoencoder_forward.11} parent=0 // pred_check_branch
    %17 = sbr.rel (0) target = $region17
  $region16: #{autoencoder_forward.11} parent=0 // pred_region
    _
  $region17: #{autoencoder_forward.11} parent=0 // pred_fallthru
    _
  // Predicated region
  $region18: #{autoencoder_forward.11} parent=0 // pred_check
    _
  $region19: #{autoencoder_forward.11} parent=0 // pred_check_branch
    %19 = sbr.rel (0) target = $region21
  $region20: #{autoencoder_forward.11} parent=0 // pred_region
    _
  $region21: #{autoencoder_forward.11} parent=0 // pred_fallthru
    _
  %v21 = vld [vmem:[%s1] sm:$0xf]
  %v22 = vld [vmem:[%s1 + $0x4] sm:$0xf]
  %v23 = vld [vmem:[%s1 + $0x8] sm:$0xf]
  %v24 = vld [vmem:[%s1 + $0xc] sm:$0xf]
  %v25 = vld [vmem:[%s1 + $0x10] sm:$0xf]
  %v26 = vld [vmem:[%s1 + $0x14] sm:$0xf]
  %v27 = vld [vmem:[%s1 + $0x18] sm:$0xf]
  %v28 = vld [vmem:[%s1 + $0x1c] sm:$0xf]
  %v29 = vld [vmem:[%s0] sm:$0xf]
  %v30 = vld [vmem:[%s0 + $0x4] sm:$0xf]
  %v31 = vld [vmem:[%s0 + $0x8] sm:$0xf]
  %v32 = vld [vmem:[%s0 + $0xc] sm:$0xf]
  %v33 = vld [vmem:[%s2] sm:$0xff]
  %v34 = vld [vmem:[%s2 + $0x8] sm:$0xff]
  %v35 = vld [vmem:[%s2 + $0x10] sm:$0xff]
  %v36 = vld [vmem:[%s2 + $0x18] sm:$0xff]
  %v37 = vld [vmem:[%s2 + $0x20] sm:$0xff]
  %v38 = vld [vmem:[%s2 + $0x28] sm:$0xff]
  %v39 = vld [vmem:[%s2 + $0x30] sm:$0xff]
  %v40 = vld [vmem:[%s2 + $0x38] sm:$0xff]
  %42 = vset.pattern.permute.xlu0 0
  %43 = vperm.xlu0 %42, %v33
  %v44 = vpop.permute.xlu0 %43
  %47 = vset.pattern.permute.xlu0 0
  %48 = vperm.xlu0 %47, %v34
  %v49 = vpop.permute.xlu0 %48
  %52 = vset.pattern.permute.xlu0 0
  %53 = vperm.xlu0 %52, %v35
  %v54 = vpop.permute.xlu0 %53
  %57 = vset.pattern.permute.xlu0 0
  %58 = vperm.xlu0 %57, %v36
  %v59 = vpop.permute.xlu0 %58
  %62 = vset.pattern.permute.xlu0 0
  %63 = vperm.xlu0 %62, %v37
  %v64 = vpop.permute.xlu0 %63
  %67 = vset.pattern.permute.xlu0 0
  %68 = vperm.xlu0 %67, %v38
  %v69 = vpop.permute.xlu0 %68
  %72 = vset.pattern.permute.xlu0 0
  %73 = vperm.xlu0 %72, %v39
  %v74 = vpop.permute.xlu0 %73
  %77 = vset.pattern.permute.xlu0 0
  %78 = vperm.xlu0 %77, %v40
  %v79 = vpop.permute.xlu0 %78
  %v89 = vunpack.c.l.b16 %v21
  %v90 = vunpack.c.l.b16 %v22
  %v91 = vunpack.c.l.b16 %v23
  %v92 = vunpack.c.l.b16 %v24
  %v93 = vunpack.c.l.b16 %v25
  %v94 = vunpack.c.l.b16 %v26
  %v95 = vunpack.c.l.b16 %v27
  %v96 = vunpack.c.l.b16 %v28
  %v97 = vpack.c.b16 %v90, %v89
  %v98 = vpack.c.b16 %v92, %v91
  %v99 = vpack.c.b16 %v94, %v93
  %v100 = vpack.c.b16 %v96, %v95
  %v105 = vunpack.c.l.b16 %v29
  %v106 = vunpack.c.l.b16 %v30
  %v107 = vunpack.c.l.b16 %v31
  %v108 = vunpack.c.l.b16 %v32
  %v109 = vpack.c.b16 %v106, %v105
  %v110 = vpack.c.b16 %v108, %v107
  %vm113 = vcmask 261120
  %v115 = vsel %vm113, %v97, 0
  %v118 = vsel %vm113, %v98, 0
  %v121 = vsel %vm113, %v99, 0
  %v124 = vsel %vm113, %v100, 0
  %126 = vmatpush.bf16.msra.mxu0 0
  %127 = vmatpush.bf16.msra.mxu0 0
  %128 = vmatpush.bf16.msra.mxu0 0
  %129 = vmatpush.bf16.msra.mxu0 0
  %130 = vmatpush.bf16.msra.mxu0 0
  %131 = vmatpush.bf16.msra.mxu0 0
  %132 = vmatpush.bf16.msra.mxu0 %v110
  %133 = vmatpush.bf16.msra.mxu0 %v109
  %134 = vmatmul.bf16.gmra.mxu0 %v115
  %v135 = vpop.f32.mrf.mxu0
  %v136 = vadd.f32 %v44, %v135
  %v137 = vpop.f32.mrf.mxu0
  %v138 = vadd.f32 %v49, %v137
  %139 = vmatmul.bf16.gmra.mxu0 %v118
  %v140 = vpop.f32.mrf.mxu0
  %v141 = vadd.f32 %v54, %v140
  %v142 = vpop.f32.mrf.mxu0
  %v143 = vadd.f32 %v59, %v142
  %144 = vmatmul.bf16.gmra.mxu0 %v121
  %v145 = vpop.f32.mrf.mxu0
  %v146 = vadd.f32 %v64, %v145
  %v147 = vpop.f32.mrf.mxu0
  %v148 = vadd.f32 %v69, %v147
  %149 = vmatmul.bf16.gmra.mxu0 %v124
  %v150 = vpop.f32.mrf.mxu0
  %v151 = vadd.f32 %v74, %v150
  %v152 = vpop.f32.mrf.mxu0
  %v153 = vadd.f32 %v79, %v152
  %154 = vdwg.mxu0
  %v155 = vsel %vm113, %v136, 0.0
  %156 = vadd.xlane.f32.xlu0 %v155
  %v157 = vpop.xlane.xlu0 %156
  %v158 = vsel %vm113, %v138, 0.0
  %159 = vadd.xlane.f32.xlu0 %v158
  %v160 = vpop.xlane.xlu0 %159
  %v161 = vsel %vm113, %v141, 0.0
  %162 = vadd.xlane.f32.xlu0 %v161
  %v163 = vpop.xlane.xlu0 %162
  %v164 = vsel %vm113, %v143, 0.0
  %165 = vadd.xlane.f32.xlu0 %v164
  %v166 = vpop.xlane.xlu0 %165
  %v167 = vsel %vm113, %v146, 0.0
  %168 = vadd.xlane.f32.xlu0 %v167
  %v169 = vpop.xlane.xlu0 %168
  %v170 = vsel %vm113, %v148, 0.0
  %171 = vadd.xlane.f32.xlu0 %v170
  %v172 = vpop.xlane.xlu0 %171
  %v173 = vsel %vm113, %v151, 0.0
  %174 = vadd.xlane.f32.xlu0 %v173
  %v175 = vpop.xlane.xlu0 %174
  %v176 = vsel %vm113, %v153, 0.0
  %177 = vadd.xlane.f32.xlu0 %v176
  %v178 = vpop.xlane.xlu0 %177
  %v179 = vmul.f32 %v136, %v136
  %v180 = vmul.f32 %v138, %v138
  %v181 = vmul.f32 %v141, %v141
  %v182 = vmul.f32 %v143, %v143
  %v183 = vmul.f32 %v146, %v146
  %v184 = vmul.f32 %v148, %v148
  %v185 = vmul.f32 %v151, %v151
  %v186 = vmul.f32 %v153, %v153
  %v187 = vsel %vm113, %v179, 0.0
  %188 = vadd.xlane.f32.xlu0 %v187
  %v189 = vpop.xlane.xlu0 %188
  %v190 = vsel %vm113, %v180, 0.0
  %191 = vadd.xlane.f32.xlu0 %v190
  %v192 = vpop.xlane.xlu0 %191
  %v193 = vsel %vm113, %v181, 0.0
  %194 = vadd.xlane.f32.xlu0 %v193
  %v195 = vpop.xlane.xlu0 %194
  %v196 = vsel %vm113, %v182, 0.0
  %197 = vadd.xlane.f32.xlu0 %v196
  %v198 = vpop.xlane.xlu0 %197
  %v199 = vsel %vm113, %v183, 0.0
  %200 = vadd.xlane.f32.xlu0 %v199
  %v201 = vpop.xlane.xlu0 %200
  %v202 = vsel %vm113, %v184, 0.0
  %203 = vadd.xlane.f32.xlu0 %v202
  %v204 = vpop.xlane.xlu0 %203
  %v205 = vsel %vm113, %v185, 0.0
  %206 = vadd.xlane.f32.xlu0 %v205
  %v207 = vpop.xlane.xlu0 %206
  %v208 = vsel %vm113, %v186, 0.0
  %209 = vadd.xlane.f32.xlu0 %v208
  %v210 = vpop.xlane.xlu0 %209
  %v211 = vadd.f32 %v157, 0.0
  %v212 = vadd.f32 %v160, 0.0
  %v213 = vadd.f32 %v211, %v163
  %v214 = vadd.f32 %v212, %v166
  %v215 = vadd.f32 %v213, %v169
  %v216 = vadd.f32 %v214, %v172
  %v217 = vadd.f32 %v215, %v175
  %v218 = vadd.f32 %v216, %v178
  %v219 = vadd.f32 %v189, 0.0
  %v220 = vadd.f32 %v192, 0.0
  %v221 = vadd.f32 %v219, %v195
  %v222 = vadd.f32 %v220, %v198
  %v223 = vadd.f32 %v221, %v201
  %v224 = vadd.f32 %v222, %v204
  %v225 = vadd.f32 %v223, %v207
  %v226 = vadd.f32 %v224, %v210
  %v227 = vmul.f32 %v217, 0.0078125
  %v228 = vmul.f32 %v218, 0.0078125
  %v229 = vmul.f32 %v225, 0.0078125
  %v230 = vmul.f32 %v226, 0.0078125
  %v231 = vmul.f32 %v227, %v227
  %v232 = vmul.f32 %v228, %v228
  %v233 = vsub.f32 %v229, %v231
  %v234 = vsub.f32 %v230, %v232
  %v235 = vmax.f32 %v233, 0.0
  %v236 = vmax.f32 %v234, 0.0
  %v237 = vadd.f32 %v235, 1e-05
  %v238 = vadd.f32 %v236, 1e-05
  %v239 = vrsqrt.pop %v237
  %v240 = vmul.f32 %v239, %v237
  %v241 = vmul.f32 %v240, %v239
  %v242 = vmul.f32 0.5, %v241
  %v243 = vsub.f32 1.5, %v242
  %v244 = vmul.f32 %v239, %v243
  %vm245 = vweird.f32 %v237
  %vm246 = vweird.f32 %v239
  %vm247 = vmor %vm245, %vm246
  %v248 = vsel %vm247, %v239, %v244
  %v249 = vrsqrt.pop %v238
  %v250 = vmul.f32 %v249, %v238
  %v251 = vmul.f32 %v250, %v249
  %v252 = vmul.f32 0.5, %v251
  %v253 = vsub.f32 1.5, %v252
  %v254 = vmul.f32 %v249, %v253
  %vm255 = vweird.f32 %v238
  %vm256 = vweird.f32 %v249
  %vm257 = vmor %vm255, %vm256
  %v258 = vsel %vm257, %v249, %v254
  %v259 = vld [vmem:[%s3] sm:$0xff]
  %v260 = vld [vmem:[%s3 + $0x8] sm:$0xff]
  %v261 = vmul.f32 %v259, %v248
  %v262 = vmul.f32 %v260, %v258
  %v263 = vld [vmem:[%s4] sm:$0xff]
  %v264 = vld [vmem:[%s4 + $0x8] sm:$0xff]
  %v265 = vmul.f32 %v227, %v261
  %v266 = vmul.f32 %v228, %v262
  %v267 = vsub.f32 %v263, %v265
  %v268 = vsub.f32 %v264, %v266
  %270 = vset.pattern.permute.xlu0 0
  %271 = vperm.xlu0 %270, %v261
  %v272 = vpop.permute.xlu0 %271
  %275 = vset.pattern.permute.xlu0 0
  %276 = vperm.xlu0 %275, %v262
  %v277 = vpop.permute.xlu0 %276
  %v279 = vmul.f32 %v136, %v272
  %v280 = vmul.f32 %v138, %v277
  %282 = vset.pattern.permute.xlu0 0
  %283 = vperm.xlu0 %282, %v267
  %v284 = vpop.permute.xlu0 %283
  %287 = vset.pattern.permute.xlu0 0
  %288 = vperm.xlu0 %287, %v268
  %v289 = vpop.permute.xlu0 %288
  %v291 = vadd.f32 %v279, %v284
  %v292 = vadd.f32 %v280, %v289
  %v293 = vmax.f32 %v291, 0.0
  %v294 = vmax.f32 %v292, 0.0
  %295 = vst.msk [vmem:[%s5] sm:$0xff] %vm113, %v293
  %296 = vst.msk [vmem:[%s5 + $0x8] sm:$0xff] %vm113, %v294
  %v297 = vmul.f32 %v141, %v272
  %v298 = vmul.f32 %v143, %v277
  %v299 = vadd.f32 %v297, %v284
  %v300 = vadd.f32 %v298, %v289
  %v301 = vmax.f32 %v299, 0.0
  %v302 = vmax.f32 %v300, 0.0
  %303 = vst.msk [vmem:[%s5 + $0x10] sm:$0xff] %vm113, %v301
  %304 = vst.msk [vmem:[%s5 + $0x18] sm:$0xff] %vm113, %v302
  %v305 = vmul.f32 %v146, %v272
  %v306 = vmul.f32 %v148, %v277
  %v307 = vadd.f32 %v305, %v284
  %v308 = vadd.f32 %v306, %v289
  %v309 = vmax.f32 %v307, 0.0
  %v310 = vmax.f32 %v308, 0.0
  %311 = vst.msk [vmem:[%s5 + $0x20] sm:$0xff] %vm113, %v309
  %312 = vst.msk [vmem:[%s5 + $0x28] sm:$0xff] %vm113, %v310
  %v313 = vmul.f32 %v151, %v272
  %v314 = vmul.f32 %v153, %v277
  %v315 = vadd.f32 %v313, %v284
  %v316 = vadd.f32 %v314, %v289
  %v317 = vmax.f32 %v315, 0.0
  %v318 = vmax.f32 %v316, 0.0
  %319 = vst.msk [vmem:[%s5 + $0x30] sm:$0xff] %vm113, %v317
  %320 = vst.msk [vmem:[%s5 + $0x38] sm:$0xff] %vm113, %v318
  // Predicated region
  $region22: #{autoencoder_forward.11} parent=0 // pred_check
    _
  $region23: #{autoencoder_forward.11} parent=0 // pred_check_branch
    %322 = sbr.rel (0) target = $region25
  $region24: #{autoencoder_forward.11} parent=0 // pred_region
    _
  $region25: #{autoencoder_forward.11} parent=0 // pred_fallthru
    _
  // Predicated region
  $region26: #{autoencoder_forward.11} parent=0 // pred_check
    _
  $region27: #{autoencoder_forward.11} parent=0 // pred_check_branch
    %324 = sbr.rel (0) target = $region29
  $region28: #{autoencoder_forward.11} parent=0 // pred_region
    _
  $region29: #{autoencoder_forward.11} parent=0 // pred_fallthru
    _

// kernel: autoencoder_forward.12
$region0: #{autoencoder_forward.12}
  #allocation0 [shape = 'u32[]', space=smem, size = 0x4, offset = 0x4, fixed_abs, tag = 'smem constant byte address 0x4 - core index']
  #allocation1 [shape = 'u32[72,128]{1,0:T(1,128)}', space=vmem, size = 0x9000, scoped, tag = 'internal scratch']
  %s0 = inlined_call_operand.vmem [shape: bf16[64,128], index: 0, kind: input, shape index: {}]
  %s1 = inlined_call_operand.vmem [shape: bf16[128,64], index: 1, kind: input, shape index: {}]
  %s2 = inlined_call_operand.vmem [shape: f32[128,1], index: 2, kind: input, shape index: {}]
  %s3 = inlined_call_operand.vmem [shape: f32[32,1], index: 3, kind: input, shape index: {}]
  %s4 = inlined_call_operand.vmem [shape: f32[32,1], index: 4, kind: input, shape index: {}]
  %s5 = inlined_call_operand.vmem [shape: f32[128,128], index: 5, kind: output, shape index: {}]
  %s6 = sld [smem:[#allocation0]]
  $region30: #{autoencoder_forward.12} parent=0
    _
  %s8 = ssub.s32 1, %s6
  %s9 = scalar_select 0, %s8, %s6
  // Predicated region
  $region2: #{autoencoder_forward.12} parent=0 // pred_check
    _
  $region3: #{autoencoder_forward.12} parent=0 // pred_check_branch
    %11 = sbr.rel (0) target = $region5
  $region4: #{autoencoder_forward.12} parent=0 // pred_region
    _
  $region5: #{autoencoder_forward.12} parent=0 // pred_fallthru
    _
  // Predicated region
  $region6: #{autoencoder_forward.12} parent=0 // pred_check
    _
  $region7: #{autoencoder_forward.12} parent=0 // pred_check_branch
    %13 = sbr.rel (0) target = $region9
  $region8: #{autoencoder_forward.12} parent=0 // pred_region
    _
  $region9: #{autoencoder_forward.12} parent=0 // pred_fallthru
    _
  // Predicated region
  $region10: #{autoencoder_forward.12} parent=0 // pred_check
    _
  $region11: #{autoencoder_forward.12} parent=0 // pred_check_branch
    %15 = sbr.rel (0) target = $region13
  $region12: #{autoencoder_forward.12} parent=0 // pred_region
    _
  $region13: #{autoencoder_forward.12} parent=0 // pred_fallthru
    _
  // Predicated region
  $region14: #{autoencoder_forward.12} parent=0 // pred_check
    _
  $region15: #{autoencoder_forward.12} parent=0 // pred_check_branch
    %17 = sbr.rel (0) target = $region17
  $region16: #{autoencoder_forward.12} parent=0 // pred_region
    _
  $region17: #{autoencoder_forward.12} parent=0 // pred_fallthru
    _
  // Predicated region
  $region18: #{autoencoder_forward.12} parent=0 // pred_check
    _
  $region19: #{autoencoder_forward.12} parent=0 // pred_check_branch
    %19 = sbr.rel (0) target = $region21
  $region20: #{autoencoder_forward.12} parent=0 // pred_region
    _
  $region21: #{autoencoder_forward.12} parent=0 // pred_fallthru
    _
  %v21 = vld [vmem:[%s1] sm:$0xf]
  %v22 = vld [vmem:[%s1 + $0x4] sm:$0xf]
  %v23 = vld [vmem:[%s1 + $0x8] sm:$0xf]
  %v24 = vld [vmem:[%s1 + $0xc] sm:$0xf]
  %v25 = vld [vmem:[%s1 + $0x10] sm:$0xf]
  %v26 = vld [vmem:[%s1 + $0x14] sm:$0xf]
  %v27 = vld [vmem:[%s1 + $0x18] sm:$0xf]
  %v28 = vld [vmem:[%s1 + $0x1c] sm:$0xf]
  %v29 = vld [vmem:[%s1 + $0x20] sm:$0xf]
  %v30 = vld [vmem:[%s1 + $0x24] sm:$0xf]
  %v31 = vld [vmem:[%s1 + $0x28] sm:$0xf]
  %v32 = vld [vmem:[%s1 + $0x2c] sm:$0xf]
  %v33 = vld [vmem:[%s1 + $0x30] sm:$0xf]
  %v34 = vld [vmem:[%s1 + $0x34] sm:$0xf]
  %v35 = vld [vmem:[%s1 + $0x38] sm:$0xf]
  %v36 = vld [vmem:[%s1 + $0x3c] sm:$0xf]
  %v37 = vld [vmem:[%s0] sm:$0xf]
  %v38 = vld [vmem:[%s0 + $0x4] sm:$0xf]
  %v39 = vld [vmem:[%s0 + $0x8] sm:$0xf]
  %v40 = vld [vmem:[%s0 + $0xc] sm:$0xf]
  %v41 = vld [vmem:[%s0 + $0x10] sm:$0xf]
  %v42 = vld [vmem:[%s0 + $0x14] sm:$0xf]
  %v43 = vld [vmem:[%s0 + $0x18] sm:$0xf]
  %v44 = vld [vmem:[%s0 + $0x1c] sm:$0xf]
  %v45 = vld [vmem:[%s2] sm:$0xff]
  %v46 = vld [vmem:[%s2 + $0x8] sm:$0xff]
  %v47 = vld [vmem:[%s2 + $0x10] sm:$0xff]
  %v48 = vld [vmem:[%s2 + $0x18] sm:$0xff]
  %v49 = vld [vmem:[%s2 + $0x20] sm:$0xff]
  %v50 = vld [vmem:[%s2 + $0x28] sm:$0xff]
  %v51 = vld [vmem:[%s2 + $0x30] sm:$0xff]
  %v52 = vld [vmem:[%s2 + $0x38] sm:$0xff]
  %v53 = vld [vmem:[%s2 + $0x40] sm:$0xff]
  %v54 = vld [vmem:[%s2 + $0x48] sm:$0xff]
  %v55 = vld [vmem:[%s2 + $0x50] sm:$0xff]
  %v56 = vld [vmem:[%s2 + $0x58] sm:$0xff]
  %v57 = vld [vmem:[%s2 + $0x60] sm:$0xff]
  %v58 = vld [vmem:[%s2 + $0x68] sm:$0xff]
  %v59 = vld [vmem:[%s2 + $0x70] sm:$0xff]
  %v60 = vld [vmem:[%s2 + $0x78] sm:$0xff]
  %62 = vset.pattern.permute.xlu0 0
  %63 = vperm.xlu0 %62, %v45
  %v64 = vpop.permute.xlu0 %63
  %67 = vset.pattern.permute.xlu0 0
  %68 = vperm.xlu0 %67, %v46
  %v69 = vpop.permute.xlu0 %68
  %72 = vset.pattern.permute.xlu0 0
  %73 = vperm.xlu0 %72, %v47
  %v74 = vpop.permute.xlu0 %73
  %77 = vset.pattern.permute.xlu0 0
  %78 = vperm.xlu0 %77, %v48
  %v79 = vpop.permute.xlu0 %78
  %82 = vset.pattern.permute.xlu0 0
  %83 = vperm.xlu0 %82, %v49
  %v84 = vpop.permute.xlu0 %83
  %87 = vset.pattern.permute.xlu0 0
  %88 = vperm.xlu0 %87, %v50
  %v89 = vpop.permute.xlu0 %88
  %92 = vset.pattern.permute.xlu0 0
  %93 = vperm.xlu0 %92, %v51
  %v94 = vpop.permute.xlu0 %93
  %97 = vset.pattern.permute.xlu0 0
  %98 = vperm.xlu0 %97, %v52
  %v99 = vpop.permute.xlu0 %98
  %102 = vset.pattern.permute.xlu0 0
  %103 = vperm.xlu0 %102, %v53
  %v104 = vpop.permute.xlu0 %103
  %107 = vset.pattern.permute.xlu0 0
  %108 = vperm.xlu0 %107, %v54
  %v109 = vpop.permute.xlu0 %108
  %112 = vset.pattern.permute.xlu0 0
  %113 = vperm.xlu0 %112, %v55
  %v114 = vpop.permute.xlu0 %113
  %117 = vset.pattern.permute.xlu0 0
  %118 = vperm.xlu0 %117, %v56
  %v119 = vpop.permute.xlu0 %118
  %122 = vset.pattern.permute.xlu0 0
  %123 = vperm.xlu0 %122, %v57
  %v124 = vpop.permute.xlu0 %123
  %127 = vset.pattern.permute.xlu0 0
  %128 = vperm.xlu0 %127, %v58
  %v129 = vpop.permute.xlu0 %128
  %132 = vset.pattern.permute.xlu0 0
  %133 = vperm.xlu0 %132, %v59
  %v134 = vpop.permute.xlu0 %133
  %137 = vset.pattern.permute.xlu0 0
  %138 = vperm.xlu0 %137, %v60
  %v139 = vpop.permute.xlu0 %138
  %v157 = vunpack.c.l.b16 %v21
  %v158 = vunpack.c.l.b16 %v22
  %v159 = vunpack.c.l.b16 %v23
  %v160 = vunpack.c.l.b16 %v24
  %v161 = vunpack.c.l.b16 %v25
  %v162 = vunpack.c.l.b16 %v26
  %v163 = vunpack.c.l.b16 %v27
  %v164 = vunpack.c.l.b16 %v28
  %v165 = vunpack.c.l.b16 %v29
  %v166 = vunpack.c.l.b16 %v30
  %v167 = vunpack.c.l.b16 %v31
  %v168 = vunpack.c.l.b16 %v32
  %v169 = vunpack.c.l.b16 %v33
  %v170 = vunpack.c.l.b16 %v34
  %v171 = vunpack.c.l.b16 %v35
  %v172 = vunpack.c.l.b16 %v36
  %v173 = vpack.c.b16 %v158, %v157
  %v174 = vpack.c.b16 %v160, %v159
  %v175 = vpack.c.b16 %v162, %v161
  %v176 = vpack.c.b16 %v164, %v163
  %v177 = vpack.c.b16 %v166, %v165
  %v178 = vpack.c.b16 %v168, %v167
  %v179 = vpack.c.b16 %v170, %v169
  %v180 = vpack.c.b16 %v172, %v171
  %v189 = vunpack.c.l.b16 %v37
  %v190 = vunpack.c.l.b16 %v38
  %v191 = vunpack.c.l.b16 %v39
  %v192 = vunpack.c.l.b16 %v40
  %v193 = vunpack.c.l.b16 %v41
  %v194 = vunpack.c.l.b16 %v42
  %v195 = vunpack.c.l.b16 %v43
  %v196 = vunpack.c.l.b16 %v44
  %v197 = vpack.c.b16 %v190, %v189
  %v198 = vpack.c.b16 %v192, %v191
  %v199 = vpack.c.b16 %v194, %v193
  %v200 = vpack.c.b16 %v196, %v195
  %vm205 = vcmask 523264
  %v207 = vsel %vm205, %v173, 0
  %v210 = vsel %vm205, %v174, 0
  %v213 = vsel %vm205, %v175, 0
  %v216 = vsel %vm205, %v176, 0
  %v219 = vsel %vm205, %v177, 0
  %v222 = vsel %vm205, %v178, 0
  %v225 = vsel %vm205, %v179, 0
  %v228 = vsel %vm205, %v180, 0
  %230 = vmatpush.bf16.msra.mxu0 0
  %231 = vmatpush.bf16.msra.mxu0 0
  %232 = vmatpush.bf16.msra.mxu0 0
  %233 = vmatpush.bf16.msra.mxu0 0
  %234 = vmatpush.bf16.msra.mxu0 %v200
  %235 = vmatpush.bf16.msra.mxu0 %v199
  %236 = vmatpush.bf16.msra.mxu0 %v198
  %237 = vmatpush.bf16.msra.mxu0 %v197
  %238 = vmatmul.bf16.gmra.mxu0 %v207
  %v239 = vpop.f32.mrf.mxu0
  %v240 = vadd.f32 %v64, %v239
  %v241 = vpop.f32.mrf.mxu0
  %v242 = vadd.f32 %v69, %v241
  %243 = vmatmul.bf16.gmra.mxu0 %v210
  %v244 = vpop.f32.mrf.mxu0
  %v245 = vadd.f32 %v74, %v244
  %v246 = vpop.f32.mrf.mxu0
  %v247 = vadd.f32 %v79, %v246
  %248 = vmatmul.bf16.gmra.mxu0 %v213
  %v249 = vpop.f32.mrf.mxu0
  %v250 = vadd.f32 %v84, %v249
  %v251 = vpop.f32.mrf.mxu0
  %v252 = vadd.f32 %v89, %v251
  %253 = vmatmul.bf16.gmra.mxu0 %v216
  %v254 = vpop.f32.mrf.mxu0
  %v255 = vadd.f32 %v94, %v254
  %v256 = vpop.f32.mrf.mxu0
  %v257 = vadd.f32 %v99, %v256
  %258 = vmatmul.bf16.gmra.mxu0 %v219
  %v259 = vpop.f32.mrf.mxu0
  %v260 = vadd.f32 %v104, %v259
  %v261 = vpop.f32.mrf.mxu0
  %v262 = vadd.f32 %v109, %v261
  %263 = vmatmul.bf16.gmra.mxu0 %v222
  %v264 = vpop.f32.mrf.mxu0
  %v265 = vadd.f32 %v114, %v264
  %v266 = vpop.f32.mrf.mxu0
  %v267 = vadd.f32 %v119, %v266
  %268 = vmatmul.bf16.gmra.mxu0 %v225
  %v269 = vpop.f32.mrf.mxu0
  %v270 = vadd.f32 %v124, %v269
  %v271 = vpop.f32.mrf.mxu0
  %v272 = vadd.f32 %v129, %v271
  %273 = vmatmul.bf16.gmra.mxu0 %v228
  %v274 = vpop.f32.mrf.mxu0
  %v275 = vadd.f32 %v134, %v274
  %v276 = vpop.f32.mrf.mxu0
  %v277 = vadd.f32 %v139, %v276
  %278 = vdwg.mxu0
  %279 = vadd.xlane.f32.xlu0 %v240
  %v280 = vpop.xlane.xlu0 %279
  %281 = vadd.xlane.f32.xlu0 %v242
  %v282 = vpop.xlane.xlu0 %281
  %283 = vadd.xlane.f32.xlu0 %v245
  %v284 = vpop.xlane.xlu0 %283
  %285 = vadd.xlane.f32.xlu0 %v247
  %v286 = vpop.xlane.xlu0 %285
  %287 = vadd.xlane.f32.xlu0 %v250
  %v288 = vpop.xlane.xlu0 %287
  %289 = vadd.xlane.f32.xlu0 %v252
  %v290 = vpop.xlane.xlu0 %289
  %291 = vadd.xlane.f32.xlu0 %v255
  %v292 = vpop.xlane.xlu0 %291
  %293 = vadd.xlane.f32.xlu0 %v257
  %v294 = vpop.xlane.xlu0 %293
  %295 = vadd.xlane.f32.xlu0 %v260
  %v296 = vpop.xlane.xlu0 %295
  %297 = vadd.xlane.f32.xlu0 %v262
  %v298 = vpop.xlane.xlu0 %297
  %299 = vadd.xlane.f32.xlu0 %v265
  %v300 = vpop.xlane.xlu0 %299
  %301 = vadd.xlane.f32.xlu0 %v267
  %v302 = vpop.xlane.xlu0 %301
  %303 = vadd.xlane.f32.xlu0 %v270
  %v304 = vpop.xlane.xlu0 %303
  %305 = vadd.xlane.f32.xlu0 %v272
  %v306 = vpop.xlane.xlu0 %305
  %307 = vadd.xlane.f32.xlu0 %v275
  %v308 = vpop.xlane.xlu0 %307
  %309 = vadd.xlane.f32.xlu0 %v277
  %v310 = vpop.xlane.xlu0 %309
  %v311 = vmul.f32 %v240, %v240
  %v312 = vmul.f32 %v242, %v242
  %v313 = vmul.f32 %v245, %v245
  %v314 = vmul.f32 %v247, %v247
  %v315 = vmul.f32 %v250, %v250
  %v316 = vmul.f32 %v252, %v252
  %v317 = vmul.f32 %v255, %v255
  %v318 = vmul.f32 %v257, %v257
  %v319 = vmul.f32 %v260, %v260
  %v320 = vmul.f32 %v262, %v262
  %v321 = vmul.f32 %v265, %v265
  %v322 = vmul.f32 %v267, %v267
  %v323 = vmul.f32 %v270, %v270
  %v324 = vmul.f32 %v272, %v272
  %v325 = vmul.f32 %v275, %v275
  %v326 = vmul.f32 %v277, %v277
  %327 = vadd.xlane.f32.xlu0 %v311
  %v328 = vpop.xlane.xlu0 %327
  %329 = vadd.xlane.f32.xlu0 %v312
  %v330 = vpop.xlane.xlu0 %329
  %331 = vadd.xlane.f32.xlu0 %v313
  %v332 = vpop.xlane.xlu0 %331
  %333 = vadd.xlane.f32.xlu0 %v314
  %v334 = vpop.xlane.xlu0 %333
  %335 = vadd.xlane.f32.xlu0 %v315
  %v336 = vpop.xlane.xlu0 %335
  %337 = vadd.xlane.f32.xlu0 %v316
  %v338 = vpop.xlane.xlu0 %337
  %339 = vadd.xlane.f32.xlu0 %v317
  %v340 = vpop.xlane.xlu0 %339
  %341 = vadd.xlane.f32.xlu0 %v318
  %v342 = vpop.xlane.xlu0 %341
  %343 = vadd.xlane.f32.xlu0 %v319
  %v344 = vpop.xlane.xlu0 %343
  %345 = vadd.xlane.f32.xlu0 %v320
  %v346 = vpop.xlane.xlu0 %345
  %347 = vadd.xlane.f32.xlu0 %v321
  %v348 = vpop.xlane.xlu0 %347
  %349 = vadd.xlane.f32.xlu0 %v322
  %v350 = vpop.xlane.xlu0 %349
  %351 = vadd.xlane.f32.xlu0 %v323
  %v352 = vpop.xlane.xlu0 %351
  %353 = vadd.xlane.f32.xlu0 %v324
  %v354 = vpop.xlane.xlu0 %353
  %355 = vadd.xlane.f32.xlu0 %v325
  %v356 = vpop.xlane.xlu0 %355
  %357 = vadd.xlane.f32.xlu0 %v326
  %v358 = vpop.xlane.xlu0 %357
  %v359 = vadd.f32 %v280, 0.0
  %v360 = vadd.f32 %v282, 0.0
  %v361 = vadd.f32 %v284, 0.0
  %v362 = vadd.f32 %v286, 0.0
  %v363 = vadd.f32 %v359, %v288
  %v364 = vadd.f32 %v360, %v290
  %v365 = vadd.f32 %v361, %v292
  %v366 = vadd.f32 %v362, %v294
  %v367 = vadd.f32 %v363, %v296
  %v368 = vadd.f32 %v364, %v298
  %v369 = vadd.f32 %v365, %v300
  %v370 = vadd.f32 %v366, %v302
  %v371 = vadd.f32 %v367, %v304
  %v372 = vadd.f32 %v368, %v306
  %v373 = vadd.f32 %v369, %v308
  %v374 = vadd.f32 %v370, %v310
  %v375 = vadd.f32 %v328, 0.0
  %v376 = vadd.f32 %v330, 0.0
  %v377 = vadd.f32 %v332, 0.0
  %v378 = vadd.f32 %v334, 0.0
  %v379 = vadd.f32 %v375, %v336
  %v380 = vadd.f32 %v376, %v338
  %v381 = vadd.f32 %v377, %v340
  %v382 = vadd.f32 %v378, %v342
  %v383 = vadd.f32 %v379, %v344
  %v384 = vadd.f32 %v380, %v346
  %v385 = vadd.f32 %v381, %v348
  %v386 = vadd.f32 %v382, %v350
  %v387 = vadd.f32 %v383, %v352
  %v388 = vadd.f32 %v384, %v354
  %v389 = vadd.f32 %v385, %v356
  %v390 = vadd.f32 %v386, %v358
  %v391 = vmul.f32 %v371, 0.001953125
  %v392 = vmul.f32 %v372, 0.001953125
  %v393 = vmul.f32 %v373, 0.001953125
  %v394 = vmul.f32 %v374, 0.001953125
  %v395 = vmul.f32 %v387, 0.001953125
  %v396 = vmul.f32 %v388, 0.001953125
  %v397 = vmul.f32 %v389, 0.001953125
  %v398 = vmul.f32 %v390, 0.001953125
  %v399 = vmul.f32 %v391, %v391
  %v400 = vmul.f32 %v392, %v392
  %v401 = vmul.f32 %v393, %v393
  %v402 = vmul.f32 %v394, %v394
  %v403 = vsub.f32 %v395, %v399
  %v404 = vsub.f32 %v396, %v400
  %v405 = vsub.f32 %v397, %v401
  %v406 = vsub.f32 %v398, %v402
  %v407 = vmax.f32 %v403, 0.0
  %v408 = vmax.f32 %v404, 0.0
  %v409 = vmax.f32 %v405, 0.0
  %v410 = vmax.f32 %v406, 0.0
  %v411 = vadd.f32 %v407, 1e-05
  %v412 = vadd.f32 %v408, 1e-05
  %v413 = vadd.f32 %v409, 1e-05
  %v414 = vadd.f32 %v410, 1e-05
  %v415 = vrsqrt.pop %v411
  %v416 = vmul.f32 %v415, %v411
  %v417 = vmul.f32 %v416, %v415
  %v418 = vmul.f32 0.5, %v417
  %v419 = vsub.f32 1.5, %v418
  %v420 = vmul.f32 %v415, %v419
  %vm421 = vweird.f32 %v411
  %vm422 = vweird.f32 %v415
  %vm423 = vmor %vm421, %vm422
  %v424 = vsel %vm423, %v415, %v420
  %v425 = vrsqrt.pop %v412
  %v426 = vmul.f32 %v425, %v412
  %v427 = vmul.f32 %v426, %v425
  %v428 = vmul.f32 0.5, %v427
  %v429 = vsub.f32 1.5, %v428
  %v430 = vmul.f32 %v425, %v429
  %vm431 = vweird.f32 %v412
  %vm432 = vweird.f32 %v425
  %vm433 = vmor %vm431, %vm432
  %v434 = vsel %vm433, %v425, %v430
  %v435 = vrsqrt.pop %v413
  %v436 = vmul.f32 %v435, %v413
  %v437 = vmul.f32 %v436, %v435
  %v438 = vmul.f32 0.5, %v437
  %v439 = vsub.f32 1.5, %v438
  %v440 = vmul.f32 %v435, %v439
  %vm441 = vweird.f32 %v413
  %vm442 = vweird.f32 %v435
  %vm443 = vmor %vm441, %vm442
  %v444 = vsel %vm443, %v435, %v440
  %v445 = vrsqrt.pop %v414
  %v446 = vmul.f32 %v445, %v414
  %v447 = vmul.f32 %v446, %v445
  %v448 = vmul.f32 0.5, %v447
  %v449 = vsub.f32 1.5, %v448
  %v450 = vmul.f32 %v445, %v449
  %vm451 = vweird.f32 %v414
  %vm452 = vweird.f32 %v445
  %vm453 = vmor %vm451, %vm452
  %v454 = vsel %vm453, %v445, %v450
  %v455 = vld [vmem:[%s3] sm:$0xff]
  %v456 = vld [vmem:[%s3 + $0x8] sm:$0xff]
  %v457 = vld [vmem:[%s3 + $0x10] sm:$0xff]
  %v458 = vld [vmem:[%s3 + $0x18] sm:$0xff]
  %v459 = vmul.f32 %v455, %v424
  %v460 = vmul.f32 %v456, %v434
  %v461 = vmul.f32 %v457, %v444
  %v462 = vmul.f32 %v458, %v454
  %v463 = vld [vmem:[%s4] sm:$0xff]
  %v464 = vld [vmem:[%s4 + $0x8] sm:$0xff]
  %v465 = vld [vmem:[%s4 + $0x10] sm:$0xff]
  %v466 = vld [vmem:[%s4 + $0x18] sm:$0xff]
  %v467 = vmul.f32 %v391, %v459
  %v468 = vmul.f32 %v392, %v460
  %v469 = vmul.f32 %v393, %v461
  %v470 = vmul.f32 %v394, %v462
  %v471 = vsub.f32 %v463, %v467
  %v472 = vsub.f32 %v464, %v468
  %v473 = vsub.f32 %v465, %v469
  %v474 = vsub.f32 %v466, %v470
  %476 = vset.pattern.permute.xlu0 0
  %477 = vperm.xlu0 %476, %v459
  %v478 = vpop.permute.xlu0 %477
  %481 = vset.pattern.permute.xlu0 0
  %482 = vperm.xlu0 %481, %v460
  %v483 = vpop.permute.xlu0 %482
  %486 = vset.pattern.permute.xlu0 0
  %487 = vperm.xlu0 %486, %v461
  %v488 = vpop.permute.xlu0 %487
  %491 = vset.pattern.permute.xlu0 0
  %492 = vperm.xlu0 %491, %v462
  %v493 = vpop.permute.xlu0 %492
  %v495 = vmul.f32 %v240, %v478
  %v496 = vmul.f32 %v242, %v483
  %v497 = vmul.f32 %v245, %v488
  %v498 = vmul.f32 %v247, %v493
  %500 = vset.pattern.permute.xlu0 0
  %501 = vperm.xlu0 %500, %v471
  %v502 = vpop.permute.xlu0 %501
  %505 = vset.pattern.permute.xlu0 0
  %506 = vperm.xlu0 %505, %v472
  %v507 = vpop.permute.xlu0 %506
  %510 = vset.pattern.permute.xlu0 0
  %511 = vperm.xlu0 %510, %v473
  %v512 = vpop.permute.xlu0 %511
  %515 = vset.pattern.permute.xlu0 0
  %516 = vperm.xlu0 %515, %v474
  %v517 = vpop.permute.xlu0 %516
  %v519 = vadd.f32 %v495, %v502
  %v520 = vadd.f32 %v496, %v507
  %v521 = vadd.f32 %v497, %v512
  %v522 = vadd.f32 %v498, %v517
  %v523 = vmax.f32 %v519, 0.0
  %v524 = vmax.f32 %v520, 0.0
  %v525 = vmax.f32 %v521, 0.0
  %v526 = vmax.f32 %v522, 0.0
  %527 = vst [vmem:[%s5] sm:$0xff] %v523
  %528 = vst [vmem:[%s5 + $0x8] sm:$0xff] %v524
  %529 = vst [vmem:[%s5 + $0x10] sm:$0xff] %v525
  %530 = vst [vmem:[%s5 + $0x18] sm:$0xff] %v526
  %v531 = vmul.f32 %v250, %v478
  %v532 = vmul.f32 %v252, %v483
  %v533 = vmul.f32 %v255, %v488
  %v534 = vmul.f32 %v257, %v493
  %v535 = vadd.f32 %v531, %v502
  %v536 = vadd.f32 %v532, %v507
  %v537 = vadd.f32 %v533, %v512
  %v538 = vadd.f32 %v534, %v517
  %v539 = vmax.f32 %v535, 0.0
  %v540 = vmax.f32 %v536, 0.0
  %v541 = vmax.f32 %v537, 0.0
  %v542 = vmax.f32 %v538, 0.0
  %543 = vst [vmem:[%s5 + $0x20] sm:$0xff] %v539
  %544 = vst [vmem:[%s5 + $0x28] sm:$0xff] %v540
  %545 = vst [vmem:[%s5 + $0x30] sm:$0xff] %v541
  %546 = vst [vmem:[%s5 + $0x38] sm:$0xff] %v542
  %v547 = vmul.f32 %v260, %v478
  %v548 = vmul.f32 %v262, %v483
  %v549 = vmul.f32 %v265, %v488
  %v550 = vmul.f32 %v267, %v493
  %v551 = vadd.f32 %v547, %v502
  %v552 = vadd.f32 %v548, %v507
  %v553 = vadd.f32 %v549, %v512
  %v554 = vadd.f32 %v550, %v517
  %v555 = vmax.f32 %v551, 0.0
  %v556 = vmax.f32 %v552, 0.0
  %v557 = vmax.f32 %v553, 0.0
  %v558 = vmax.f32 %v554, 0.0
  %559 = vst [vmem:[%s5 + $0x40] sm:$0xff] %v555
  %560 = vst [vmem:[%s5 + $0x48] sm:$0xff] %v556
  %561 = vst [vmem:[%s5 + $0x50] sm:$0xff] %v557
  %562 = vst [vmem:[%s5 + $0x58] sm:$0xff] %v558
  %v563 = vmul.f32 %v270, %v478
  %v564 = vmul.f32 %v272, %v483
  %v565 = vmul.f32 %v275, %v488
  %v566 = vmul.f32 %v277, %v493
  %v567 = vadd.f32 %v563, %v502
  %v568 = vadd.f32 %v564, %v507
  %v569 = vadd.f32 %v565, %v512
  %v570 = vadd.f32 %v566, %v517
  %v571 = vmax.f32 %v567, 0.0
  %v572 = vmax.f32 %v568, 0.0
  %v573 = vmax.f32 %v569, 0.0
  %v574 = vmax.f32 %v570, 0.0
  %575 = vst [vmem:[%s5 + $0x60] sm:$0xff] %v571
  %576 = vst [vmem:[%s5 + $0x68] sm:$0xff] %v572
  %577 = vst [vmem:[%s5 + $0x70] sm:$0xff] %v573
  %578 = vst [vmem:[%s5 + $0x78] sm:$0xff] %v574
  // Predicated region
  $region22: #{autoencoder_forward.12} parent=0 // pred_check
    _
  $region23: #{autoencoder_forward.12} parent=0 // pred_check_branch
    %580 = sbr.rel (0) target = $region25
  $region24: #{autoencoder_forward.12} parent=0 // pred_region
    _
  $region25: #{autoencoder_forward.12} parent=0 // pred_fallthru
    _
  // Predicated region
  $region26: #{autoencoder_forward.12} parent=0 // pred_check
    _
  $region27: #{autoencoder_forward.12} parent=0 // pred_check_branch
    %582 = sbr.rel (0) target = $region29
  $region28: #{autoencoder_forward.12} parent=0 // pred_region
    _
  $region29: #{autoencoder_forward.12} parent=0 // pred_fallthru
    _

// kernel: autoencoder_forward.13
$region0: #{autoencoder_forward.13}
  #allocation0 [shape = 'u32[]', space=smem, size = 0x4, offset = 0x4, fixed_abs, tag = 'smem constant byte address 0x4 - core index']
  #allocation1 [shape = 'u32[72,128]{1,0:T(1,128)}', space=vmem, size = 0x9000, scoped, tag = 'internal scratch']
  %s0 = inlined_call_operand.vmem [shape: bf16[128,512], index: 0, kind: input, shape index: {}]
  %s1 = inlined_call_operand.vmem [shape: bf16[12,128], index: 1, kind: input, shape index: {}]
  %s2 = inlined_call_operand.vmem [shape: f32[12,1], index: 2, kind: input, shape index: {}]
  %s3 = inlined_call_operand.vmem [shape: f32[12,512], index: 3, kind: output, shape index: {}]
  %s4 = sld [smem:[#allocation0]]
  $region22: #{autoencoder_forward.13} parent=0
    _
  %s6 = ssub.s32 1, %s4
  %s7 = scalar_select 0, %s6, %s4
  // Predicated region
  $region2: #{autoencoder_forward.13} parent=0 // pred_check
    _
  $region3: #{autoencoder_forward.13} parent=0 // pred_check_branch
    %9 = sbr.rel (0) target = $region5
  $region4: #{autoencoder_forward.13} parent=0 // pred_region
    _
  $region5: #{autoencoder_forward.13} parent=0 // pred_fallthru
    _
  // Predicated region
  $region6: #{autoencoder_forward.13} parent=0 // pred_check
    _
  $region7: #{autoencoder_forward.13} parent=0 // pred_check_branch
    %11 = sbr.rel (0) target = $region9
  $region8: #{autoencoder_forward.13} parent=0 // pred_region
    _
  $region9: #{autoencoder_forward.13} parent=0 // pred_fallthru
    _
  // Predicated region
  $region10: #{autoencoder_forward.13} parent=0 // pred_check
    _
  $region11: #{autoencoder_forward.13} parent=0 // pred_check_branch
    %13 = sbr.rel (0) target = $region13
  $region12: #{autoencoder_forward.13} parent=0 // pred_region
    _
  $region13: #{autoencoder_forward.13} parent=0 // pred_fallthru
    _
  %v14 = vld [vmem:[%s1] sm:$0xf]
  %v15 = vld [vmem:[%s1 + $0x4] sm:$0x3]
  %v16 = vld [vmem:[%s0] sm:$0xff]
  %v17 = vld [vmem:[%s0 + $0x8] sm:$0xff]
  %v18 = vld [vmem:[%s0 + $0x10] sm:$0xff]
  %v19 = vld [vmem:[%s0 + $0x18] sm:$0xff]
  %v20 = vld [vmem:[%s0 + $0x20] sm:$0xff]
  %v21 = vld [vmem:[%s0 + $0x28] sm:$0xff]
  %v22 = vld [vmem:[%s0 + $0x30] sm:$0xff]
  %v23 = vld [vmem:[%s0 + $0x38] sm:$0xff]
  %v24 = vld [vmem:[%s0 + $0x40] sm:$0xff]
  %v25 = vld [vmem:[%s0 + $0x48] sm:$0xff]
  %v26 = vld [vmem:[%s0 + $0x50] sm:$0xff]
  %v27 = vld [vmem:[%s0 + $0x58] sm:$0xff]
  %v28 = vld [vmem:[%s0 + $0x60] sm:$0xff]
  %v29 = vld [vmem:[%s0 + $0x68] sm:$0xff]
  %v30 = vld [vmem:[%s0 + $0x70] sm:$0xff]
  %v31 = vld [vmem:[%s0 + $0x78] sm:$0xff]
  %v32 = vld [vmem:[%s0 + $0x80] sm:$0xff]
  %v33 = vld [vmem:[%s0 + $0x88] sm:$0xff]
  %v34 = vld [vmem:[%s0 + $0x90] sm:$0xff]
  %v35 = vld [vmem:[%s0 + $0x98] sm:$0xff]
  %v36 = vld [vmem:[%s0 + $0xa0] sm:$0xff]
  %v37 = vld [vmem:[%s0 + $0xa8] sm:$0xff]
  %v38 = vld [vmem:[%s0 + $0xb0] sm:$0xff]
  %v39 = vld [vmem:[%s0 + $0xb8] sm:$0xff]
  %v40 = vld [vmem:[%s0 + $0xc0] sm:$0xff]
  %v41 = vld [vmem:[%s0 + $0xc8] sm:$0xff]
  %v42 = vld [vmem:[%s0 + $0xd0] sm:$0xff]
  %v43 = vld [vmem:[%s0 + $0xd8] sm:$0xff]
  %v44 = vld [vmem:[%s0 + $0xe0] sm:$0xff]
  %v45 = vld [vmem:[%s0 + $0xe8] sm:$0xff]
  %v46 = vld [vmem:[%s0 + $0xf0] sm:$0xff]
  %v47 = vld [vmem:[%s0 + $0xf8] sm:$0xff]
  %v48 = vld [vmem:[%s2] sm:$0xff]
  %v49 = vld [vmem:[%s2 + $0x8] sm:$0xf]
  %51 = vset.pattern.permute.xlu0 0
  %52 = vperm.xlu0 %51, %v48
  %v53 = vpop.permute.xlu0 %52
  %56 = vset.pattern.permute.xlu0 0
  %57 = vperm.xlu0 %56, %v49
  %v58 = vpop.permute.xlu0 %57
  %v62 = vunpack.c.l.b16 %v14
  %v63 = vunpack.c.l.b16 %v15
  %v64 = vpack.c.b16 %v63, %v62
  %v98 = vunpack.c.l.b16 %v16
  %v99 = vunpack.c.h.b16 %v16
  %v100 = vunpack.c.l.b16 %v17
  %v101 = vunpack.c.h.b16 %v17
  %v102 = vunpack.c.l.b16 %v18
  %v103 = vunpack.c.h.b16 %v18
  %v104 = vunpack.c.l.b16 %v19
  %v105 = vunpack.c.h.b16 %v19
  %v106 = vunpack.c.l.b16 %v20
  %v107 = vunpack.c.h.b16 %v20
  %v108 = vunpack.c.l.b16 %v21
  %v109 = vunpack.c.h.b16 %v21
  %v110 = vunpack.c.l.b16 %v22
  %v111 = vunpack.c.h.b16 %v22
  %v112 = vunpack.c.l.b16 %v23
  %v113 = vunpack.c.h.b16 %v23
  %v114 = vunpack.c.l.b16 %v24
  %v115 = vunpack.c.h.b16 %v24
  %v116 = vunpack.c.l.b16 %v25
  %v117 = vunpack.c.h.b16 %v25
  %v118 = vunpack.c.l.b16 %v26
  %v119 = vunpack.c.h.b16 %v26
  %v120 = vunpack.c.l.b16 %v27
  %v121 = vunpack.c.h.b16 %v27
  %v122 = vunpack.c.l.b16 %v28
  %v123 = vunpack.c.h.b16 %v28
  %v124 = vunpack.c.l.b16 %v29
  %v125 = vunpack.c.h.b16 %v29
  %v126 = vunpack.c.l.b16 %v30
  %v127 = vunpack.c.h.b16 %v30
  %v128 = vunpack.c.l.b16 %v31
  %v129 = vunpack.c.h.b16 %v31
  %v130 = vunpack.c.l.b16 %v32
  %v131 = vunpack.c.h.b16 %v32
  %v132 = vunpack.c.l.b16 %v33
  %v133 = vunpack.c.h.b16 %v33
  %v134 = vunpack.c.l.b16 %v34
  %v135 = vunpack.c.h.b16 %v34
  %v136 = vunpack.c.l.b16 %v35
  %v137 = vunpack.c.h.b16 %v35
  %v138 = vunpack.c.l.b16 %v36
  %v139 = vunpack.c.h.b16 %v36
  %v140 = vunpack.c.l.b16 %v37
  %v141 = vunpack.c.h.b16 %v37
  %v142 = vunpack.c.l.b16 %v38
  %v143 = vunpack.c.h.b16 %v38
  %v144 = vunpack.c.l.b16 %v39
  %v145 = vunpack.c.h.b16 %v39
  %v146 = vunpack.c.l.b16 %v40
  %v147 = vunpack.c.h.b16 %v40
  %v148 = vunpack.c.l.b16 %v41
  %v149 = vunpack.c.h.b16 %v41
  %v150 = vunpack.c.l.b16 %v42
  %v151 = vunpack.c.h.b16 %v42
  %v152 = vunpack.c.l.b16 %v43
  %v153 = vunpack.c.h.b16 %v43
  %v154 = vunpack.c.l.b16 %v44
  %v155 = vunpack.c.h.b16 %v44
  %v156 = vunpack.c.l.b16 %v45
  %v157 = vunpack.c.h.b16 %v45
  %v158 = vunpack.c.l.b16 %v46
  %v159 = vunpack.c.h.b16 %v46
  %v160 = vunpack.c.l.b16 %v47
  %v161 = vunpack.c.h.b16 %v47
  %v162 = vpack.c.b16 %v102, %v98
  %v163 = vpack.c.b16 %v103, %v99
  %v164 = vpack.c.b16 %v104, %v100
  %v165 = vpack.c.b16 %v105, %v101
  %v166 = vpack.c.b16 %v110, %v106
  %v167 = vpack.c.b16 %v111, %v107
  %v168 = vpack.c.b16 %v112, %v108
  %v169 = vpack.c.b16 %v113, %v109
  %v170 = vpack.c.b16 %v118, %v114
  %v171 = vpack.c.b16 %v119, %v115
  %v172 = vpack.c.b16 %v120, %v116
  %v173 = vpack.c.b16 %v121, %v117
  %v174 = vpack.c.b16 %v126, %v122
  %v175 = vpack.c.b16 %v127, %v123
  %v176 = vpack.c.b16 %v128, %v124
  %v177 = vpack.c.b16 %v129, %v125
  %v178 = vpack.c.b16 %v134, %v130
  %v179 = vpack.c.b16 %v135, %v131
  %v180 = vpack.c.b16 %v136, %v132
  %v181 = vpack.c.b16 %v137, %v133
  %v182 = vpack.c.b16 %v142, %v138
  %v183 = vpack.c.b16 %v143, %v139
  %v184 = vpack.c.b16 %v144, %v140
  %v185 = vpack.c.b16 %v145, %v141
  %v186 = vpack.c.b16 %v150, %v146
  %v187 = vpack.c.b16 %v151, %v147
  %v188 = vpack.c.b16 %v152, %v148
  %v189 = vpack.c.b16 %v153, %v149
  %v190 = vpack.c.b16 %v158, %v154
  %v191 = vpack.c.b16 %v159, %v155
  %v192 = vpack.c.b16 %v160, %v156
  %v193 = vpack.c.b16 %v161, %v157
  %226 = vmatpush.bf16.msra.mxu0 %v190
  %227 = vmatpush.bf16.msra.mxu0 %v186
  %228 = vmatpush.bf16.msra.mxu0 %v182
  %229 = vmatpush.bf16.msra.mxu0 %v178
  %230 = vmatpush.bf16.msra.mxu0 %v174
  %231 = vmatpush.bf16.msra.mxu0 %v170
  %232 = vmatpush.bf16.msra.mxu0 %v166
  %233 = vmatpush.bf16.msra.mxu0 %v162
  %234 = vmatmul.bf16.gmra.mxu0 %v64
  %v235 = vpop.f32.mrf.mxu0
  %v236 = vadd.f32 %v53, %v235
  %v237 = vpop.f32.mrf.mxu0
  %v238 = vadd.f32 %v58, %v237
  %239 = vdwg.mxu0
  %240 = vmatpush.bf16.msra.mxu0 %v191
  %241 = vmatpush.bf16.msra.mxu0 %v187
  %242 = vmatpush.bf16.msra.mxu0 %v183
  %243 = vmatpush.bf16.msra.mxu0 %v179
  %244 = vmatpush.bf16.msra.mxu0 %v175
  %245 = vmatpush.bf16.msra.mxu0 %v171
  %246 = vmatpush.bf16.msra.mxu0 %v167
  %247 = vmatpush.bf16.msra.mxu0 %v163
  %248 = vmatmul.bf16.gmra.mxu0 %v64
  %v249 = vpop.f32.mrf.mxu0
  %v250 = vadd.f32 %v53, %v249
  %v251 = vpop.f32.mrf.mxu0
  %v252 = vadd.f32 %v58, %v251
  %253 = vdwg.mxu0
  %254 = vmatpush.bf16.msra.mxu0 %v192
  %255 = vmatpush.bf16.msra.mxu0 %v188
  %256 = vmatpush.bf16.msra.mxu0 %v184
  %257 = vmatpush.bf16.msra.mxu0 %v180
  %258 = vmatpush.bf16.msra.mxu0 %v176
  %259 = vmatpush.bf16.msra.mxu0 %v172
  %260 = vmatpush.bf16.msra.mxu0 %v168
  %261 = vmatpush.bf16.msra.mxu0 %v164
  %262 = vmatmul.bf16.gmra.mxu0 %v64
  %v263 = vpop.f32.mrf.mxu0
  %v264 = vadd.f32 %v53, %v263
  %v265 = vpop.f32.mrf.mxu0
  %v266 = vadd.f32 %v58, %v265
  %267 = vdwg.mxu0
  %268 = vmatpush.bf16.msra.mxu0 %v193
  %269 = vmatpush.bf16.msra.mxu0 %v189
  %270 = vmatpush.bf16.msra.mxu0 %v185
  %271 = vmatpush.bf16.msra.mxu0 %v181
  %272 = vmatpush.bf16.msra.mxu0 %v177
  %273 = vmatpush.bf16.msra.mxu0 %v173
  %274 = vmatpush.bf16.msra.mxu0 %v169
  %275 = vmatpush.bf16.msra.mxu0 %v165
  %276 = vmatmul.bf16.gmra.mxu0 %v64
  %v277 = vpop.f32.mrf.mxu0
  %v278 = vadd.f32 %v53, %v277
  %v279 = vpop.f32.mrf.mxu0
  %v280 = vadd.f32 %v58, %v279
  %281 = vdwg.mxu0
  %v282 = vtanh.pop %v236
  %v283 = vtanh.pop %v250
  %v284 = vtanh.pop %v264
  %v285 = vtanh.pop %v278
  %v286 = vtanh.pop %v238
  %v287 = vtanh.pop %v252
  %v288 = vtanh.pop %v266
  %v289 = vtanh.pop %v280
  %290 = vst [vmem:[%s3] sm:$0xff] %v282
  %291 = vst [vmem:[%s3 + $0x8] sm:$0xff] %v283
  %292 = vst [vmem:[%s3 + $0x10] sm:$0xff] %v284
  %293 = vst [vmem:[%s3 + $0x18] sm:$0xff] %v285
  %294 = vst [vmem:[%s3 + $0x20] sm:$0xf] %v286
  %295 = vst [vmem:[%s3 + $0x28] sm:$0xf] %v287
  %296 = vst [vmem:[%s3 + $0x30] sm:$0xf] %v288
  %297 = vst [vmem:[%s3 + $0x38] sm:$0xf] %v289
  // Predicated region
  $region14: #{autoencoder_forward.13} parent=0 // pred_check
    _
  $region15: #{autoencoder_forward.13} parent=0 // pred_check_branch
    %299 = sbr.rel (0) target = $region17
  $region16: #{autoencoder_forward.13} parent=0 // pred_region
    _
  $region17: #{autoencoder_forward.13} parent=0 // pred_fallthru
    _
  // Predicated region
  $region18: #{autoencoder_forward.13} parent=0 // pred_check
    _
  $region19: #{autoencoder_forward.13} parent=0 // pred_check_branch
    %301 = sbr.rel (0) target = $region21
  $region20: #{autoencoder_forward.13} parent=0 // pred_region
    _
  $region21: #{autoencoder_forward.13} parent=0 // pred_fallthru
    _

</llo_original>
